<compile_context>
chip_gen: v5e
topology: v5e:2x2
jax: 0.10.0
libtpu: 0.0.40
codegen_flags: <defaults>
</compile_context>

<pallas_src>
import numpy as np
import jax
import jax.numpy as jnp
from jax.experimental import pallas as pl
from jax.experimental.pallas import tpu as pltpu

# ----- model hyper-parameters (small, consistent with the module's __init__) -----
BATCH  = 2
SEQ    = 8      # seq_length
DIM    = 32     # embedding_dim
DEPTH  = 2      # num_layers
HEADS  = 4      # num_heads
HIDDEN = 64     # hidden_dim (mlp_dim)
LN_EPS = 1e-5   # torch.nn.LayerNorm default

N_TOK = BATCH * SEQ          # 16 folded (batch, seq) rows
NK    = HEADS * N_TOK        # 64 head-packed key/value rows
HD    = DIM // HEADS         # 8 head dim

LOG_SEQ  = int(np.log2(SEQ))     # 3
LOG_NTOK = int(np.log2(N_TOK))   # 4
LOG_HD   = int(np.log2(HD))      # 3
assert (1 << LOG_SEQ) == SEQ and (1 << LOG_NTOK) == N_TOK and (1 << LOG_HD) == HD


# ------------------------- in-kernel math helpers -------------------------
def _erf(x):
    # Abramowitz & Stegun 7.1.26 rational approximation, |err| < 1.5e-7.
    a1, a2, a3, a4, a5 = 0.254829592, -0.284496736, 1.421413741, -1.453152027, 1.061405429
    p = 0.3275911
    sgn = jnp.where(x >= 0.0, 1.0, -1.0)
    ax = jnp.abs(x)
    t = 1.0 / (1.0 + p * ax)     # exact divide kept here (accuracy headroom for the test)
    poly = ((((a5 * t + a4) * t + a3) * t + a2) * t + a1) * t
    return sgn * (1.0 - poly * jnp.exp(-ax * ax))


def _gelu_exact(x):
    # torch.nn.GELU() default (erf-based, approximate='none')
    return 0.5 * x * (1.0 + _erf(x * (1.0 / np.sqrt(2.0))))


def _layernorm(x, g, b):
    mu = jnp.mean(x, axis=-1, keepdims=True)
    var = jnp.mean((x - mu) ** 2, axis=-1, keepdims=True)
    return (x - mu) * jax.lax.rsqrt(var + LN_EPS) * g + b


# ------------------------------- the kernel -------------------------------
def time_transformer_kernel(x_ref, pos_ref,
                            ln1_g_ref, ln1_b_ref, wqkv_ref, wo_ref, bo_ref,
                            ln2_g_ref, ln2_b_ref, w1_ref, b1_ref, w2_ref, b2_ref,
                            lnf_g_ref, lnf_b_ref,
                            o_ref):
    scale = 1.0 / np.sqrt(HD)

    # ---- constant block-diagonal masks (iota + shifts; hoisted out of the layer loop) ----
    # head mask: row-block h of the tiled K/V keeps only head h's lanes.
    rr = jax.lax.broadcasted_iota(jnp.int32, (NK, DIM), 0)
    rc = jax.lax.broadcasted_iota(jnp.int32, (NK, DIM), 1)
    head_mask = ((rr >> LOG_NTOK) == (rc >> LOG_HD)).astype(jnp.float32)        # (NK, D)

    # batch mask: query row (b, s) may only attend keys of the same batch b.
    sr = jax.lax.broadcasted_iota(jnp.int32, (N_TOK, NK), 0)
    sc = jax.lax.broadcasted_iota(jnp.int32, (N_TOK, NK), 1)
    batch_ok = (sr >> LOG_SEQ) == ((sc & (N_TOK - 1)) >> LOG_SEQ)               # (N_TOK, NK) bool

    # block-sum matrix: broadcasts each head-block's softmax denominator over its 16 lanes.
    br = jax.lax.broadcasted_iota(jnp.int32, (NK, NK), 0)
    bc = jax.lax.broadcasted_iota(jnp.int32, (NK, NK), 1)
    block_sum = ((br >> LOG_NTOK) == (bc >> LOG_NTOK)).astype(jnp.float32)      # (NK, NK)

    # LearnedPositionalEncoding (pre_dropout == identity); batch folded into sublanes.
    pos = pos_ref[...]                                                          # (S, D)
    x = x_ref[...] + jnp.concatenate([pos] * BATCH, axis=0)                     # (N_TOK, D)

    for l in range(DEPTH):                         # static unroll over layers
        # ---- Residual(PreNormDrop(SelfAttention)) ----
        h = _layernorm(x, ln1_g_ref[l], ln1_b_ref[l])
        qkv = jnp.dot(h, wqkv_ref[l], preferred_element_type=jnp.float32)       # (N_TOK, 3D)
        q = qkv[:, 0:DIM] * scale
        k = qkv[:, DIM:2 * DIM]
        v = qkv[:, 2 * DIM:3 * DIM]

        # Pack all heads along sublanes with a block-diagonal lane mask: no transposes.
        k_bd = jnp.concatenate([k] * HEADS, axis=0) * head_mask                 # (NK, D)
        v_bd = jnp.concatenate([v] * HEADS, axis=0) * head_mask                 # (NK, D)

        # All-batch, all-head scores in ONE matmul: s[i, h*N_TOK + j] = <q_h[i], k_h[j]>*scale
        s = jax.lax.dot_general(q, k_bd, (((1,), (1,)), ((), ())),
                                preferred_element_type=jnp.float32)             # (N_TOK, NK)
        s = jnp.where(batch_ok, s, -1e30)          # forbid cross-batch attention
        m = jnp.max(s, axis=-1, keepdims=True)
        e = jnp.exp(s - m)
        denom = jnp.dot(e, block_sum, preferred_element_type=jnp.float32)       # per-head sums
        p = e * pl.reciprocal(denom, approx=True)  # softmax; attn_drop == identity

        # PV matmul lands directly in concat-heads layout (lane c belongs to head c//HD).
        attn = jnp.dot(p, v_bd, preferred_element_type=jnp.float32)             # (N_TOK, D)
        x = x + jnp.dot(attn, wo_ref[l], preferred_element_type=jnp.float32) + bo_ref[l]

        # ---- Residual(PreNorm(FeedForward)) ----
        h2 = _layernorm(x, ln2_g_ref[l], ln2_b_ref[l])
        mm = jnp.dot(h2, w1_ref[l], preferred_element_type=jnp.float32) + b1_ref[l]
        mm = _gelu_exact(mm)
        mm = jnp.dot(mm, w2_ref[l], preferred_element_type=jnp.float32) + b2_ref[l]
        x = x + mm

    # final pre_head_ln
    o_ref[...] = _layernorm(x, lnf_g_ref[0], lnf_b_ref[0])


# ------------------------------- the wrapper -------------------------------
PARAM_ORDER = ["pos", "ln1_g", "ln1_b", "wqkv", "wo", "bo",
               "ln2_g", "ln2_b", "w1", "b1", "w2", "b2", "lnf_g", "lnf_b"]


def time_transformer_forward(x, params):
    B, S, D = x.shape
    x2 = x.reshape(B * S, D)                      # fold batch into the sublane axis
    args = [params[k] for k in PARAM_ORDER]

    def full_spec(a):
        nd = a.ndim
        return pl.BlockSpec(a.shape, lambda i, _nd=nd: (0,) * _nd)

    grid_spec = pltpu.PrefetchScalarGridSpec(
        num_scalar_prefetch=0,
        grid=(1,),                                # single invocation: no per-batch prologue
        in_specs=[full_spec(x2)] + [full_spec(a) for a in args],
        out_specs=pl.BlockSpec((B * S, D), lambda i: (0, 0)),
        scratch_shapes=[],
    )
    out = pl.pallas_call(
        time_transformer_kernel,
        out_shape=jax.ShapeDtypeStruct((B * S, D), jnp.float32),
        grid_spec=grid_spec,
        compiler_params=pltpu.CompilerParams(dimension_semantics=("arbitrary",)),
    )(x2, *args)
    return out.reshape(B, S, D)


# ------------------------- deterministic parameter init -------------------------
def init_params(key):
    ks = jax.random.split(key, 12)
    n = lambda k, shape, s=0.1: (s * jax.random.normal(k, shape)).astype(jnp.float32)
    return {
        "pos":   n(ks[0], (SEQ, DIM), 0.02),                       # (1, seq, dim) param, squeezed
        "ln1_g": (1.0 + n(ks[1], (DEPTH, 1, DIM), 0.05)),
        "ln1_b": n(ks[2], (DEPTH, 1, DIM), 0.05),
        "wqkv":  n(ks[3], (DEPTH, DIM, 3 * DIM)),                  # qkv Linear, bias=False
        "wo":    n(ks[4], (DEPTH, DIM, DIM)),
        "bo":    n(ks[5], (DEPTH, 1, DIM)),
        "ln2_g": (1.0 + n(ks[6], (DEPTH, 1, DIM), 0.05)),
        "ln2_b": n(ks[7], (DEPTH, 1, DIM), 0.05),
        "w1":    n(ks[8], (DEPTH, DIM, HIDDEN)),
        "b1":    n(ks[9], (DEPTH, 1, HIDDEN)),
        "w2":    n(ks[10], (DEPTH, HIDDEN, DIM)),
        "b2":    n(ks[11], (DEPTH, 1, DIM)),
        "lnf_g": jnp.ones((1, 1, DIM), jnp.float32),
        "lnf_b": jnp.zeros((1, 1, DIM), jnp.float32),
    }


# ---------------------------- pure-JAX reference ----------------------------
def reference(x, p):
    hd = DIM // HEADS
    scale = 1.0 / np.sqrt(hd)

    def ln(x, g, b):
        mu = x.mean(-1, keepdims=True)
        var = ((x - mu) ** 2).mean(-1, keepdims=True)
        return (x - mu) / jnp.sqrt(var + LN_EPS) * g + b

    x = x + p["pos"][None]
    B, S, D = x.shape
    for l in range(DEPTH):
        h = ln(x, p["ln1_g"][l, 0], p["ln1_b"][l, 0])
        qkv = h @ p["wqkv"][l]
        q, k, v = qkv[..., :D], qkv[..., D:2 * D], qkv[..., 2 * D:]
        q = q.reshape(B, S, HEADS, hd).transpose(0, 2, 1, 3)
        k = k.reshape(B, S, HEADS, hd).transpose(0, 2, 1, 3)
        v = v.reshape(B, S, HEADS, hd).transpose(0, 2, 1, 3)
        a = jax.nn.softmax((q @ jnp.swapaxes(k, -1, -2)) * scale, axis=-1)
        o = (a @ v).transpose(0, 2, 1, 3).reshape(B, S, D)
        x = x + o @ p["wo"][l] + p["bo"][l, 0]
        h2 = ln(x, p["ln2_g"][l, 0], p["ln2_b"][l, 0])
        m = h2 @ p["w1"][l] + p["b1"][l, 0]
        m = 0.5 * m * (1.0 + jax.scipy.special.erf(m / np.sqrt(2.0)))  # exact GELU
        m = m @ p["w2"][l] + p["b2"][l, 0]
        x = x + m
    return ln(x, p["lnf_g"][0, 0], p["lnf_b"][0, 0])


if __name__ == "__main__":
    key = jax.random.PRNGKey(0)
    kx, kp = jax.random.split(key)
    x = jax.random.normal(kx, (BATCH, SEQ, DIM), dtype=jnp.float32)
    params = init_params(kp)

    out = jax.block_until_ready(time_transformer_forward(x, params))

    with jax.default_matmul_precision("float32"):
        ref = jax.block_until_ready(reference(x, params))

    np.testing.assert_allclose(np.asarray(out), np.asarray(ref), atol=2e-3, rtol=2e-3)
    print("KERNEL_OK")
</pallas_src>

<mosaic_0001>
module attributes {stable_mosaic.version = 11 : i64} {
  func.func @time_transformer_kernel(%arg0: i32, %arg1: memref<16x32xf32, #tpu.memory_space<vmem>>, %arg2: memref<8x32xf32, #tpu.memory_space<vmem>>, %arg3: memref<2x1x32xf32, #tpu.memory_space<vmem>>, %arg4: memref<2x1x32xf32, #tpu.memory_space<vmem>>, %arg5: memref<2x32x96xf32, #tpu.memory_space<vmem>>, %arg6: memref<2x32x32xf32, #tpu.memory_space<vmem>>, %arg7: memref<2x1x32xf32, #tpu.memory_space<vmem>>, %arg8: memref<2x1x32xf32, #tpu.memory_space<vmem>>, %arg9: memref<2x1x32xf32, #tpu.memory_space<vmem>>, %arg10: memref<2x32x64xf32, #tpu.memory_space<vmem>>, %arg11: memref<2x1x64xf32, #tpu.memory_space<vmem>>, %arg12: memref<2x64x32xf32, #tpu.memory_space<vmem>>, %arg13: memref<2x1x32xf32, #tpu.memory_space<vmem>>, %arg14: memref<1x1x32xf32, #tpu.memory_space<vmem>>, %arg15: memref<1x1x32xf32, #tpu.memory_space<vmem>>, %arg16: memref<16x32xf32, #tpu.memory_space<vmem>>) attributes {dimension_semantics = [#tpu.dimension_semantics<arbitrary>], iteration_bounds = array<i64: 1>, scalar_prefetch = 0 : i64, scratch_operands = 0 : i64, tpu.core_type = #tpu.core_type<tc>, window_params = [{pipeline_mode = #tpu.pipeline_mode<synchronous>, transform_indices = @transform_0, window_bounds = array<i64: 16, 32>}, {pipeline_mode = #tpu.pipeline_mode<synchronous>, transform_indices = @transform_1, window_bounds = array<i64: 8, 32>}, {pipeline_mode = #tpu.pipeline_mode<synchronous>, transform_indices = @transform_2, window_bounds = array<i64: 2, 1, 32>}, {pipeline_mode = #tpu.pipeline_mode<synchronous>, transform_indices = @transform_3, window_bounds = array<i64: 2, 1, 32>}, {pipeline_mode = #tpu.pipeline_mode<synchronous>, transform_indices = @transform_4, window_bounds = array<i64: 2, 32, 96>}, {pipeline_mode = #tpu.pipeline_mode<synchronous>, transform_indices = @transform_5, window_bounds = array<i64: 2, 32, 32>}, {pipeline_mode = #tpu.pipeline_mode<synchronous>, transform_indices = @transform_6, window_bounds = array<i64: 2, 1, 32>}, {pipeline_mode = #tpu.pipeline_mode<synchronous>, transform_indices = @transform_7, window_bounds = array<i64: 2, 1, 32>}, {pipeline_mode = #tpu.pipeline_mode<synchronous>, transform_indices = @transform_8, window_bounds = array<i64: 2, 1, 32>}, {pipeline_mode = #tpu.pipeline_mode<synchronous>, transform_indices = @transform_9, window_bounds = array<i64: 2, 32, 64>}, {pipeline_mode = #tpu.pipeline_mode<synchronous>, transform_indices = @transform_10, window_bounds = array<i64: 2, 1, 64>}, {pipeline_mode = #tpu.pipeline_mode<synchronous>, transform_indices = @transform_11, window_bounds = array<i64: 2, 64, 32>}, {pipeline_mode = #tpu.pipeline_mode<synchronous>, transform_indices = @transform_12, window_bounds = array<i64: 2, 1, 32>}, {pipeline_mode = #tpu.pipeline_mode<synchronous>, transform_indices = @transform_13, window_bounds = array<i64: 1, 1, 32>}, {pipeline_mode = #tpu.pipeline_mode<synchronous>, transform_indices = @transform_14, window_bounds = array<i64: 1, 1, 32>}, {pipeline_mode = #tpu.pipeline_mode<synchronous>, transform_indices = @transform_15, window_bounds = array<i64: 16, 32>}]} {
    %0 = tpu.iota {dimensions = array<i32: 0>} : vector<64x32xi32>
    %1 = tpu.iota {dimensions = array<i32: 1>} : vector<64x32xi32>
    %c4_i32 = arith.constant 4 : i32
    %2 = vector.broadcast %c4_i32 : i32 to vector<64x32xi32>
    %3 = arith.shrsi %0, %2 : vector<64x32xi32>
    %c3_i32 = arith.constant 3 : i32
    %4 = vector.broadcast %c3_i32 : i32 to vector<64x32xi32>
    %5 = arith.shrsi %1, %4 : vector<64x32xi32>
    %6 = arith.cmpi eq, %3, %5 : vector<64x32xi32>
    %7 = arith.extui %6 : vector<64x32xi1> to vector<64x32xi32>
    %8 = arith.sitofp %7 : vector<64x32xi32> to vector<64x32xf32>
    %9 = tpu.iota {dimensions = array<i32: 0>} : vector<16x64xi32>
    %10 = tpu.iota {dimensions = array<i32: 1>} : vector<16x64xi32>
    %c3_i32_0 = arith.constant 3 : i32
    %11 = vector.broadcast %c3_i32_0 : i32 to vector<16x64xi32>
    %12 = arith.shrsi %9, %11 : vector<16x64xi32>
    %c15_i32 = arith.constant 15 : i32
    %13 = vector.broadcast %c15_i32 : i32 to vector<16x64xi32>
    %14 = arith.andi %10, %13 : vector<16x64xi32>
    %c3_i32_1 = arith.constant 3 : i32
    %15 = vector.broadcast %c3_i32_1 : i32 to vector<16x64xi32>
    %16 = arith.shrsi %14, %15 : vector<16x64xi32>
    %17 = arith.cmpi eq, %12, %16 : vector<16x64xi32>
    %18 = tpu.iota {dimensions = array<i32: 0>} : vector<64x64xi32>
    %19 = tpu.iota {dimensions = array<i32: 1>} : vector<64x64xi32>
    %c4_i32_2 = arith.constant 4 : i32
    %20 = vector.broadcast %c4_i32_2 : i32 to vector<64x64xi32>
    %21 = arith.shrsi %18, %20 : vector<64x64xi32>
    %c4_i32_3 = arith.constant 4 : i32
    %22 = vector.broadcast %c4_i32_3 : i32 to vector<64x64xi32>
    %23 = arith.shrsi %19, %22 : vector<64x64xi32>
    %24 = arith.cmpi eq, %21, %23 : vector<64x64xi32>
    %25 = arith.extui %24 : vector<64x64xi1> to vector<64x64xi32>
    %26 = arith.sitofp %25 : vector<64x64xi32> to vector<64x64xf32>
    %c0 = arith.constant 0 : index
    %c0_4 = arith.constant 0 : index
    %27 = vector.load %arg2[%c0, %c0_4] : memref<8x32xf32, #tpu.memory_space<vmem>>, vector<8x32xf32>
    %c0_5 = arith.constant 0 : index
    %c0_6 = arith.constant 0 : index
    %28 = vector.load %arg1[%c0_5, %c0_6] : memref<16x32xf32, #tpu.memory_space<vmem>>, vector<16x32xf32>
    %29 = tpu.concatenate %27, %27 in 0 : vector<8x32xf32>, vector<8x32xf32> -> vector<16x32xf32>
    %30 = arith.addf %28, %29 : vector<16x32xf32>
    %c0_7 = arith.constant 0 : index
    %c0_8 = arith.constant 0 : index
    %c0_9 = arith.constant 0 : index
    %31 = vector.load %arg3[%c0_7, %c0_8, %c0_9] : memref<2x1x32xf32, #tpu.memory_space<vmem>>, vector<1x1x32xf32>
    %32 = vector.shape_cast %31 : vector<1x1x32xf32> to vector<1x32xf32>
    %c0_10 = arith.constant 0 : index
    %c0_11 = arith.constant 0 : index
    %c0_12 = arith.constant 0 : index
    %33 = vector.load %arg4[%c0_10, %c0_11, %c0_12] : memref<2x1x32xf32, #tpu.memory_space<vmem>>, vector<1x1x32xf32>
    %34 = vector.shape_cast %33 : vector<1x1x32xf32> to vector<1x32xf32>
    %cst = arith.constant dense<0.000000e+00> : vector<16xf32>
    %35 = vector.multi_reduction <add>, %30, %cst [1] : vector<16x32xf32> to vector<16xf32>
    %36 = vector.shape_cast %35 : vector<16xf32> to vector<16x1xf32>
    %cst_13 = arith.constant 3.200000e+01 : f32
    %37 = vector.broadcast %cst_13 : f32 to vector<16x1xf32>
    %38 = arith.divf %36, %37 : vector<16x1xf32>
    %39 = vector.broadcast %38 : vector<16x1xf32> to vector<16x32xf32>
    %40 = arith.subf %30, %39 : vector<16x32xf32>
    %41 = arith.mulf %40, %40 : vector<16x32xf32>
    %cst_14 = arith.constant dense<0.000000e+00> : vector<16xf32>
    %42 = vector.multi_reduction <add>, %41, %cst_14 [1] : vector<16x32xf32> to vector<16xf32>
    %43 = vector.shape_cast %42 : vector<16xf32> to vector<16x1xf32>
    %cst_15 = arith.constant 3.200000e+01 : f32
    %44 = vector.broadcast %cst_15 : f32 to vector<16x1xf32>
    %45 = arith.divf %43, %44 : vector<16x1xf32>
    %46 = vector.broadcast %38 : vector<16x1xf32> to vector<16x32xf32>
    %47 = arith.subf %30, %46 : vector<16x32xf32>
    %cst_16 = arith.constant 9.99999974E-6 : f32
    %48 = vector.broadcast %cst_16 : f32 to vector<16x1xf32>
    %49 = arith.addf %45, %48 : vector<16x1xf32>
    %50 = math.rsqrt %49 : vector<16x1xf32>
    %51 = vector.broadcast %50 : vector<16x1xf32> to vector<16x32xf32>
    %52 = arith.mulf %47, %51 : vector<16x32xf32>
    %53 = vector.broadcast %32 : vector<1x32xf32> to vector<16x32xf32>
    %54 = arith.mulf %52, %53 : vector<16x32xf32>
    %55 = vector.broadcast %34 : vector<1x32xf32> to vector<16x32xf32>
    %56 = arith.addf %54, %55 : vector<16x32xf32>
    %c0_17 = arith.constant 0 : index
    %c0_18 = arith.constant 0 : index
    %c0_19 = arith.constant 0 : index
    %57 = vector.load %arg5[%c0_17, %c0_18, %c0_19] : memref<2x32x96xf32, #tpu.memory_space<vmem>>, vector<1x32x96xf32>
    %58 = vector.shape_cast %57 : vector<1x32x96xf32> to vector<32x96xf32>
    %cst_20 = arith.constant dense<0.000000e+00> : vector<16x96xf32>
    %59 = tpu.matmul %56, %58, %cst_20 {dimension_numbers = #tpu.dot_dimension_numbers<[1], [0], [0], [1], [0, 0, 1, 1], [], []>} : vector<16x32xf32>, vector<32x96xf32>, vector<16x96xf32> -> vector<16x96xf32>
    %60 = vector.extract_strided_slice %59 {offsets = [0, 0], sizes = [16, 32], strides = [1, 1]} : vector<16x96xf32> to vector<16x32xf32>
    %cst_21 = arith.constant 0.353553385 : f32
    %61 = vector.broadcast %cst_21 : f32 to vector<16x32xf32>
    %62 = arith.mulf %60, %61 : vector<16x32xf32>
    %63 = vector.extract_strided_slice %59 {offsets = [0, 32], sizes = [16, 32], strides = [1, 1]} : vector<16x96xf32> to vector<16x32xf32>
    %64 = vector.extract_strided_slice %59 {offsets = [0, 64], sizes = [16, 32], strides = [1, 1]} : vector<16x96xf32> to vector<16x32xf32>
    %65 = tpu.concatenate %63, %63, %63, %63 in 0 : vector<16x32xf32>, vector<16x32xf32>, vector<16x32xf32>, vector<16x32xf32> -> vector<64x32xf32>
    %66 = arith.mulf %65, %8 : vector<64x32xf32>
    %67 = tpu.concatenate %64, %64, %64, %64 in 0 : vector<16x32xf32>, vector<16x32xf32>, vector<16x32xf32>, vector<16x32xf32> -> vector<64x32xf32>
    %68 = arith.mulf %67, %8 : vector<64x32xf32>
    %cst_22 = arith.constant dense<0.000000e+00> : vector<16x64xf32>
    %69 = tpu.matmul %62, %66, %cst_22 {dimension_numbers = #tpu.dot_dimension_numbers<[1], [1], [0], [0], [0, 0, 1, 0], [], []>} : vector<16x32xf32>, vector<64x32xf32>, vector<16x64xf32> -> vector<16x64xf32>
    %cst_23 = arith.constant -1.000000e+30 : f32
    %70 = vector.broadcast %cst_23 : f32 to vector<16x64xf32>
    %71 = arith.select %17, %69, %70 : vector<16x64xi1>, vector<16x64xf32>
    %cst_24 = arith.constant dense<0xFF800000> : vector<16xf32>
    %72 = vector.multi_reduction <maximumf>, %71, %cst_24 [1] : vector<16x64xf32> to vector<16xf32>
    %73 = vector.shape_cast %72 : vector<16xf32> to vector<16x1xf32>
    %74 = vector.broadcast %73 : vector<16x1xf32> to vector<16x64xf32>
    %75 = arith.subf %71, %74 : vector<16x64xf32>
    %76 = math.exp %75 : vector<16x64xf32>
    %cst_25 = arith.constant dense<0.000000e+00> : vector<16x64xf32>
    %77 = tpu.matmul %76, %26, %cst_25 {dimension_numbers = #tpu.dot_dimension_numbers<[1], [0], [0], [1], [0, 0, 1, 1], [], []>} : vector<16x64xf32>, vector<64x64xf32>, vector<16x64xf32> -> vector<16x64xf32>
    %78 = tpu.reciprocal %77 {approx = true} : vector<16x64xf32> -> vector<16x64xf32>
    %79 = arith.mulf %76, %78 : vector<16x64xf32>
    %cst_26 = arith.constant dense<0.000000e+00> : vector<16x32xf32>
    %80 = tpu.matmul %79, %68, %cst_26 {dimension_numbers = #tpu.dot_dimension_numbers<[1], [0], [0], [1], [0, 0, 1, 1], [], []>} : vector<16x64xf32>, vector<64x32xf32>, vector<16x32xf32> -> vector<16x32xf32>
    %c0_27 = arith.constant 0 : index
    %c0_28 = arith.constant 0 : index
    %c0_29 = arith.constant 0 : index
    %81 = vector.load %arg6[%c0_27, %c0_28, %c0_29] : memref<2x32x32xf32, #tpu.memory_space<vmem>>, vector<1x32x32xf32>
    %82 = vector.shape_cast %81 : vector<1x32x32xf32> to vector<32x32xf32>
    %cst_30 = arith.constant dense<0.000000e+00> : vector<16x32xf32>
    %83 = tpu.matmul %80, %82, %cst_30 {dimension_numbers = #tpu.dot_dimension_numbers<[1], [0], [0], [1], [0, 0, 1, 1], [], []>} : vector<16x32xf32>, vector<32x32xf32>, vector<16x32xf32> -> vector<16x32xf32>
    %84 = arith.addf %30, %83 : vector<16x32xf32>
    %c0_31 = arith.constant 0 : index
    %c0_32 = arith.constant 0 : index
    %c0_33 = arith.constant 0 : index
    %85 = vector.load %arg7[%c0_31, %c0_32, %c0_33] : memref<2x1x32xf32, #tpu.memory_space<vmem>>, vector<1x1x32xf32>
    %86 = vector.shape_cast %85 : vector<1x1x32xf32> to vector<1x32xf32>
    %87 = vector.broadcast %86 : vector<1x32xf32> to vector<16x32xf32>
    %88 = arith.addf %84, %87 : vector<16x32xf32>
    %c0_34 = arith.constant 0 : index
    %c0_35 = arith.constant 0 : index
    %c0_36 = arith.constant 0 : index
    %89 = vector.load %arg8[%c0_34, %c0_35, %c0_36] : memref<2x1x32xf32, #tpu.memory_space<vmem>>, vector<1x1x32xf32>
    %90 = vector.shape_cast %89 : vector<1x1x32xf32> to vector<1x32xf32>
    %c0_37 = arith.constant 0 : index
    %c0_38 = arith.constant 0 : index
    %c0_39 = arith.constant 0 : index
    %91 = vector.load %arg9[%c0_37, %c0_38, %c0_39] : memref<2x1x32xf32, #tpu.memory_space<vmem>>, vector<1x1x32xf32>
    %92 = vector.shape_cast %91 : vector<1x1x32xf32> to vector<1x32xf32>
    %cst_40 = arith.constant dense<0.000000e+00> : vector<16xf32>
    %93 = vector.multi_reduction <add>, %88, %cst_40 [1] : vector<16x32xf32> to vector<16xf32>
    %94 = vector.shape_cast %93 : vector<16xf32> to vector<16x1xf32>
    %cst_41 = arith.constant 3.200000e+01 : f32
    %95 = vector.broadcast %cst_41 : f32 to vector<16x1xf32>
    %96 = arith.divf %94, %95 : vector<16x1xf32>
    %97 = vector.broadcast %96 : vector<16x1xf32> to vector<16x32xf32>
    %98 = arith.subf %88, %97 : vector<16x32xf32>
    %99 = arith.mulf %98, %98 : vector<16x32xf32>
    %cst_42 = arith.constant dense<0.000000e+00> : vector<16xf32>
    %100 = vector.multi_reduction <add>, %99, %cst_42 [1] : vector<16x32xf32> to vector<16xf32>
    %101 = vector.shape_cast %100 : vector<16xf32> to vector<16x1xf32>
    %cst_43 = arith.constant 3.200000e+01 : f32
    %102 = vector.broadcast %cst_43 : f32 to vector<16x1xf32>
    %103 = arith.divf %101, %102 : vector<16x1xf32>
    %104 = vector.broadcast %96 : vector<16x1xf32> to vector<16x32xf32>
    %105 = arith.subf %88, %104 : vector<16x32xf32>
    %cst_44 = arith.constant 9.99999974E-6 : f32
    %106 = vector.broadcast %cst_44 : f32 to vector<16x1xf32>
    %107 = arith.addf %103, %106 : vector<16x1xf32>
    %108 = math.rsqrt %107 : vector<16x1xf32>
    %109 = vector.broadcast %108 : vector<16x1xf32> to vector<16x32xf32>
    %110 = arith.mulf %105, %109 : vector<16x32xf32>
    %111 = vector.broadcast %90 : vector<1x32xf32> to vector<16x32xf32>
    %112 = arith.mulf %110, %111 : vector<16x32xf32>
    %113 = vector.broadcast %92 : vector<1x32xf32> to vector<16x32xf32>
    %114 = arith.addf %112, %113 : vector<16x32xf32>
    %c0_45 = arith.constant 0 : index
    %c0_46 = arith.constant 0 : index
    %c0_47 = arith.constant 0 : index
    %115 = vector.load %arg10[%c0_45, %c0_46, %c0_47] : memref<2x32x64xf32, #tpu.memory_space<vmem>>, vector<1x32x64xf32>
    %116 = vector.shape_cast %115 : vector<1x32x64xf32> to vector<32x64xf32>
    %cst_48 = arith.constant dense<0.000000e+00> : vector<16x64xf32>
    %117 = tpu.matmul %114, %116, %cst_48 {dimension_numbers = #tpu.dot_dimension_numbers<[1], [0], [0], [1], [0, 0, 1, 1], [], []>} : vector<16x32xf32>, vector<32x64xf32>, vector<16x64xf32> -> vector<16x64xf32>
    %c0_49 = arith.constant 0 : index
    %c0_50 = arith.constant 0 : index
    %c0_51 = arith.constant 0 : index
    %118 = vector.load %arg11[%c0_49, %c0_50, %c0_51] : memref<2x1x64xf32, #tpu.memory_space<vmem>>, vector<1x1x64xf32>
    %119 = vector.shape_cast %118 : vector<1x1x64xf32> to vector<1x64xf32>
    %120 = vector.broadcast %119 : vector<1x64xf32> to vector<16x64xf32>
    %121 = arith.addf %117, %120 : vector<16x64xf32>
    %cst_52 = arith.constant 5.000000e-01 : f32
    %122 = vector.broadcast %cst_52 : f32 to vector<16x64xf32>
    %123 = arith.mulf %122, %121 : vector<16x64xf32>
    %cst_53 = arith.constant 0.707106769 : f32
    %124 = vector.broadcast %cst_53 : f32 to vector<16x64xf32>
    %125 = arith.mulf %121, %124 : vector<16x64xf32>
    %cst_54 = arith.constant 0.000000e+00 : f32
    %126 = vector.broadcast %cst_54 : f32 to vector<16x64xf32>
    %127 = arith.cmpf oge, %125, %126 : vector<16x64xf32>
    %cst_55 = arith.constant 1.000000e+00 : f32
    %cst_56 = arith.constant -1.000000e+00 : f32
    %128 = vector.broadcast %cst_55 : f32 to vector<16x64xf32>
    %129 = vector.broadcast %cst_56 : f32 to vector<16x64xf32>
    %130 = arith.select %127, %128, %129 : vector<16x64xi1>, vector<16x64xf32>
    %131 = math.absf %125 : vector<16x64xf32>
    %cst_57 = arith.constant 0.327591091 : f32
    %132 = vector.broadcast %cst_57 : f32 to vector<16x64xf32>
    %133 = arith.mulf %132, %131 : vector<16x64xf32>
    %cst_58 = arith.constant 1.000000e+00 : f32
    %134 = vector.broadcast %cst_58 : f32 to vector<16x64xf32>
    %135 = arith.addf %134, %133 : vector<16x64xf32>
    %cst_59 = arith.constant 1.000000e+00 : f32
    %136 = vector.broadcast %cst_59 : f32 to vector<16x64xf32>
    %137 = arith.divf %136, %135 : vector<16x64xf32>
    %cst_60 = arith.constant 1.06140542 : f32
    %138 = vector.broadcast %cst_60 : f32 to vector<16x64xf32>
    %139 = arith.mulf %138, %137 : vector<16x64xf32>
    %cst_61 = arith.constant -1.45315206 : f32
    %140 = vector.broadcast %cst_61 : f32 to vector<16x64xf32>
    %141 = arith.addf %139, %140 : vector<16x64xf32>
    %142 = arith.mulf %141, %137 : vector<16x64xf32>
    %cst_62 = arith.constant 1.42141378 : f32
    %143 = vector.broadcast %cst_62 : f32 to vector<16x64xf32>
    %144 = arith.addf %142, %143 : vector<16x64xf32>
    %145 = arith.mulf %144, %137 : vector<16x64xf32>
    %cst_63 = arith.constant -0.284496725 : f32
    %146 = vector.broadcast %cst_63 : f32 to vector<16x64xf32>
    %147 = arith.addf %145, %146 : vector<16x64xf32>
    %148 = arith.mulf %147, %137 : vector<16x64xf32>
    %cst_64 = arith.constant 0.254829586 : f32
    %149 = vector.broadcast %cst_64 : f32 to vector<16x64xf32>
    %150 = arith.addf %148, %149 : vector<16x64xf32>
    %151 = arith.mulf %150, %137 : vector<16x64xf32>
    %cst_65 = arith.constant 0.000000e+00 : f32
    %152 = vector.broadcast %cst_65 : f32 to vector<16x64xf32>
    %153 = arith.subf %152, %131 : vector<16x64xf32>
    %154 = arith.mulf %153, %131 : vector<16x64xf32>
    %155 = math.exp %154 : vector<16x64xf32>
    %156 = arith.mulf %151, %155 : vector<16x64xf32>
    %cst_66 = arith.constant 1.000000e+00 : f32
    %157 = vector.broadcast %cst_66 : f32 to vector<16x64xf32>
    %158 = arith.subf %157, %156 : vector<16x64xf32>
    %159 = arith.mulf %130, %158 : vector<16x64xf32>
    %cst_67 = arith.constant 1.000000e+00 : f32
    %160 = vector.broadcast %cst_67 : f32 to vector<16x64xf32>
    %161 = arith.addf %160, %159 : vector<16x64xf32>
    %162 = arith.mulf %123, %161 : vector<16x64xf32>
    %c0_68 = arith.constant 0 : index
    %c0_69 = arith.constant 0 : index
    %c0_70 = arith.constant 0 : index
    %163 = vector.load %arg12[%c0_68, %c0_69, %c0_70] : memref<2x64x32xf32, #tpu.memory_space<vmem>>, vector<1x64x32xf32>
    %164 = vector.shape_cast %163 : vector<1x64x32xf32> to vector<64x32xf32>
    %cst_71 = arith.constant dense<0.000000e+00> : vector<16x32xf32>
    %165 = tpu.matmul %162, %164, %cst_71 {dimension_numbers = #tpu.dot_dimension_numbers<[1], [0], [0], [1], [0, 0, 1, 1], [], []>} : vector<16x64xf32>, vector<64x32xf32>, vector<16x32xf32> -> vector<16x32xf32>
    %c0_72 = arith.constant 0 : index
    %c0_73 = arith.constant 0 : index
    %c0_74 = arith.constant 0 : index
    %166 = vector.load %arg13[%c0_72, %c0_73, %c0_74] : memref<2x1x32xf32, #tpu.memory_space<vmem>>, vector<1x1x32xf32>
    %167 = vector.shape_cast %166 : vector<1x1x32xf32> to vector<1x32xf32>
    %168 = vector.broadcast %167 : vector<1x32xf32> to vector<16x32xf32>
    %169 = arith.addf %165, %168 : vector<16x32xf32>
    %170 = arith.addf %88, %169 : vector<16x32xf32>
    %c1 = arith.constant 1 : index
    %c0_75 = arith.constant 0 : index
    %c0_76 = arith.constant 0 : index
    %171 = vector.load %arg3[%c1, %c0_75, %c0_76] : memref<2x1x32xf32, #tpu.memory_space<vmem>>, vector<1x1x32xf32>
    %172 = vector.shape_cast %171 : vector<1x1x32xf32> to vector<1x32xf32>
    %c1_77 = arith.constant 1 : index
    %c0_78 = arith.constant 0 : index
    %c0_79 = arith.constant 0 : index
    %173 = vector.load %arg4[%c1_77, %c0_78, %c0_79] : memref<2x1x32xf32, #tpu.memory_space<vmem>>, vector<1x1x32xf32>
    %174 = vector.shape_cast %173 : vector<1x1x32xf32> to vector<1x32xf32>
    %cst_80 = arith.constant dense<0.000000e+00> : vector<16xf32>
    %175 = vector.multi_reduction <add>, %170, %cst_80 [1] : vector<16x32xf32> to vector<16xf32>
    %176 = vector.shape_cast %175 : vector<16xf32> to vector<16x1xf32>
    %cst_81 = arith.constant 3.200000e+01 : f32
    %177 = vector.broadcast %cst_81 : f32 to vector<16x1xf32>
    %178 = arith.divf %176, %177 : vector<16x1xf32>
    %179 = vector.broadcast %178 : vector<16x1xf32> to vector<16x32xf32>
    %180 = arith.subf %170, %179 : vector<16x32xf32>
    %181 = arith.mulf %180, %180 : vector<16x32xf32>
    %cst_82 = arith.constant dense<0.000000e+00> : vector<16xf32>
    %182 = vector.multi_reduction <add>, %181, %cst_82 [1] : vector<16x32xf32> to vector<16xf32>
    %183 = vector.shape_cast %182 : vector<16xf32> to vector<16x1xf32>
    %cst_83 = arith.constant 3.200000e+01 : f32
    %184 = vector.broadcast %cst_83 : f32 to vector<16x1xf32>
    %185 = arith.divf %183, %184 : vector<16x1xf32>
    %186 = vector.broadcast %178 : vector<16x1xf32> to vector<16x32xf32>
    %187 = arith.subf %170, %186 : vector<16x32xf32>
    %cst_84 = arith.constant 9.99999974E-6 : f32
    %188 = vector.broadcast %cst_84 : f32 to vector<16x1xf32>
    %189 = arith.addf %185, %188 : vector<16x1xf32>
    %190 = math.rsqrt %189 : vector<16x1xf32>
    %191 = vector.broadcast %190 : vector<16x1xf32> to vector<16x32xf32>
    %192 = arith.mulf %187, %191 : vector<16x32xf32>
    %193 = vector.broadcast %172 : vector<1x32xf32> to vector<16x32xf32>
    %194 = arith.mulf %192, %193 : vector<16x32xf32>
    %195 = vector.broadcast %174 : vector<1x32xf32> to vector<16x32xf32>
    %196 = arith.addf %194, %195 : vector<16x32xf32>
    %c1_85 = arith.constant 1 : index
    %c0_86 = arith.constant 0 : index
    %c0_87 = arith.constant 0 : index
    %197 = vector.load %arg5[%c1_85, %c0_86, %c0_87] : memref<2x32x96xf32, #tpu.memory_space<vmem>>, vector<1x32x96xf32>
    %198 = vector.shape_cast %197 : vector<1x32x96xf32> to vector<32x96xf32>
    %cst_88 = arith.constant dense<0.000000e+00> : vector<16x96xf32>
    %199 = tpu.matmul %196, %198, %cst_88 {dimension_numbers = #tpu.dot_dimension_numbers<[1], [0], [0], [1], [0, 0, 1, 1], [], []>} : vector<16x32xf32>, vector<32x96xf32>, vector<16x96xf32> -> vector<16x96xf32>
    %200 = vector.extract_strided_slice %199 {offsets = [0, 0], sizes = [16, 32], strides = [1, 1]} : vector<16x96xf32> to vector<16x32xf32>
    %cst_89 = arith.constant 0.353553385 : f32
    %201 = vector.broadcast %cst_89 : f32 to vector<16x32xf32>
    %202 = arith.mulf %200, %201 : vector<16x32xf32>
    %203 = vector.extract_strided_slice %199 {offsets = [0, 32], sizes = [16, 32], strides = [1, 1]} : vector<16x96xf32> to vector<16x32xf32>
    %204 = vector.extract_strided_slice %199 {offsets = [0, 64], sizes = [16, 32], strides = [1, 1]} : vector<16x96xf32> to vector<16x32xf32>
    %205 = tpu.concatenate %203, %203, %203, %203 in 0 : vector<16x32xf32>, vector<16x32xf32>, vector<16x32xf32>, vector<16x32xf32> -> vector<64x32xf32>
    %206 = arith.mulf %205, %8 : vector<64x32xf32>
    %207 = tpu.concatenate %204, %204, %204, %204 in 0 : vector<16x32xf32>, vector<16x32xf32>, vector<16x32xf32>, vector<16x32xf32> -> vector<64x32xf32>
    %208 = arith.mulf %207, %8 : vector<64x32xf32>
    %cst_90 = arith.constant dense<0.000000e+00> : vector<16x64xf32>
    %209 = tpu.matmul %202, %206, %cst_90 {dimension_numbers = #tpu.dot_dimension_numbers<[1], [1], [0], [0], [0, 0, 1, 0], [], []>} : vector<16x32xf32>, vector<64x32xf32>, vector<16x64xf32> -> vector<16x64xf32>
    %cst_91 = arith.constant -1.000000e+30 : f32
    %210 = vector.broadcast %cst_91 : f32 to vector<16x64xf32>
    %211 = arith.select %17, %209, %210 : vector<16x64xi1>, vector<16x64xf32>
    %cst_92 = arith.constant dense<0xFF800000> : vector<16xf32>
    %212 = vector.multi_reduction <maximumf>, %211, %cst_92 [1] : vector<16x64xf32> to vector<16xf32>
    %213 = vector.shape_cast %212 : vector<16xf32> to vector<16x1xf32>
    %214 = vector.broadcast %213 : vector<16x1xf32> to vector<16x64xf32>
    %215 = arith.subf %211, %214 : vector<16x64xf32>
    %216 = math.exp %215 : vector<16x64xf32>
    %cst_93 = arith.constant dense<0.000000e+00> : vector<16x64xf32>
    %217 = tpu.matmul %216, %26, %cst_93 {dimension_numbers = #tpu.dot_dimension_numbers<[1], [0], [0], [1], [0, 0, 1, 1], [], []>} : vector<16x64xf32>, vector<64x64xf32>, vector<16x64xf32> -> vector<16x64xf32>
    %218 = tpu.reciprocal %217 {approx = true} : vector<16x64xf32> -> vector<16x64xf32>
    %219 = arith.mulf %216, %218 : vector<16x64xf32>
    %cst_94 = arith.constant dense<0.000000e+00> : vector<16x32xf32>
    %220 = tpu.matmul %219, %208, %cst_94 {dimension_numbers = #tpu.dot_dimension_numbers<[1], [0], [0], [1], [0, 0, 1, 1], [], []>} : vector<16x64xf32>, vector<64x32xf32>, vector<16x32xf32> -> vector<16x32xf32>
    %c1_95 = arith.constant 1 : index
    %c0_96 = arith.constant 0 : index
    %c0_97 = arith.constant 0 : index
    %221 = vector.load %arg6[%c1_95, %c0_96, %c0_97] : memref<2x32x32xf32, #tpu.memory_space<vmem>>, vector<1x32x32xf32>
    %222 = vector.shape_cast %221 : vector<1x32x32xf32> to vector<32x32xf32>
    %cst_98 = arith.constant dense<0.000000e+00> : vector<16x32xf32>
    %223 = tpu.matmul %220, %222, %cst_98 {dimension_numbers = #tpu.dot_dimension_numbers<[1], [0], [0], [1], [0, 0, 1, 1], [], []>} : vector<16x32xf32>, vector<32x32xf32>, vector<16x32xf32> -> vector<16x32xf32>
    %224 = arith.addf %170, %223 : vector<16x32xf32>
    %c1_99 = arith.constant 1 : index
    %c0_100 = arith.constant 0 : index
    %c0_101 = arith.constant 0 : index
    %225 = vector.load %arg7[%c1_99, %c0_100, %c0_101] : memref<2x1x32xf32, #tpu.memory_space<vmem>>, vector<1x1x32xf32>
    %226 = vector.shape_cast %225 : vector<1x1x32xf32> to vector<1x32xf32>
    %227 = vector.broadcast %226 : vector<1x32xf32> to vector<16x32xf32>
    %228 = arith.addf %224, %227 : vector<16x32xf32>
    %c1_102 = arith.constant 1 : index
    %c0_103 = arith.constant 0 : index
    %c0_104 = arith.constant 0 : index
    %229 = vector.load %arg8[%c1_102, %c0_103, %c0_104] : memref<2x1x32xf32, #tpu.memory_space<vmem>>, vector<1x1x32xf32>
    %230 = vector.shape_cast %229 : vector<1x1x32xf32> to vector<1x32xf32>
    %c1_105 = arith.constant 1 : index
    %c0_106 = arith.constant 0 : index
    %c0_107 = arith.constant 0 : index
    %231 = vector.load %arg9[%c1_105, %c0_106, %c0_107] : memref<2x1x32xf32, #tpu.memory_space<vmem>>, vector<1x1x32xf32>
    %232 = vector.shape_cast %231 : vector<1x1x32xf32> to vector<1x32xf32>
    %cst_108 = arith.constant dense<0.000000e+00> : vector<16xf32>
    %233 = vector.multi_reduction <add>, %228, %cst_108 [1] : vector<16x32xf32> to vector<16xf32>
    %234 = vector.shape_cast %233 : vector<16xf32> to vector<16x1xf32>
    %cst_109 = arith.constant 3.200000e+01 : f32
    %235 = vector.broadcast %cst_109 : f32 to vector<16x1xf32>
    %236 = arith.divf %234, %235 : vector<16x1xf32>
    %237 = vector.broadcast %236 : vector<16x1xf32> to vector<16x32xf32>
    %238 = arith.subf %228, %237 : vector<16x32xf32>
    %239 = arith.mulf %238, %238 : vector<16x32xf32>
    %cst_110 = arith.constant dense<0.000000e+00> : vector<16xf32>
    %240 = vector.multi_reduction <add>, %239, %cst_110 [1] : vector<16x32xf32> to vector<16xf32>
    %241 = vector.shape_cast %240 : vector<16xf32> to vector<16x1xf32>
    %cst_111 = arith.constant 3.200000e+01 : f32
    %242 = vector.broadcast %cst_111 : f32 to vector<16x1xf32>
    %243 = arith.divf %241, %242 : vector<16x1xf32>
    %244 = vector.broadcast %236 : vector<16x1xf32> to vector<16x32xf32>
    %245 = arith.subf %228, %244 : vector<16x32xf32>
    %cst_112 = arith.constant 9.99999974E-6 : f32
    %246 = vector.broadcast %cst_112 : f32 to vector<16x1xf32>
    %247 = arith.addf %243, %246 : vector<16x1xf32>
    %248 = math.rsqrt %247 : vector<16x1xf32>
    %249 = vector.broadcast %248 : vector<16x1xf32> to vector<16x32xf32>
    %250 = arith.mulf %245, %249 : vector<16x32xf32>
    %251 = vector.broadcast %230 : vector<1x32xf32> to vector<16x32xf32>
    %252 = arith.mulf %250, %251 : vector<16x32xf32>
    %253 = vector.broadcast %232 : vector<1x32xf32> to vector<16x32xf32>
    %254 = arith.addf %252, %253 : vector<16x32xf32>
    %c1_113 = arith.constant 1 : index
    %c0_114 = arith.constant 0 : index
    %c0_115 = arith.constant 0 : index
    %255 = vector.load %arg10[%c1_113, %c0_114, %c0_115] : memref<2x32x64xf32, #tpu.memory_space<vmem>>, vector<1x32x64xf32>
    %256 = vector.shape_cast %255 : vector<1x32x64xf32> to vector<32x64xf32>
    %cst_116 = arith.constant dense<0.000000e+00> : vector<16x64xf32>
    %257 = tpu.matmul %254, %256, %cst_116 {dimension_numbers = #tpu.dot_dimension_numbers<[1], [0], [0], [1], [0, 0, 1, 1], [], []>} : vector<16x32xf32>, vector<32x64xf32>, vector<16x64xf32> -> vector<16x64xf32>
    %c1_117 = arith.constant 1 : index
    %c0_118 = arith.constant 0 : index
    %c0_119 = arith.constant 0 : index
    %258 = vector.load %arg11[%c1_117, %c0_118, %c0_119] : memref<2x1x64xf32, #tpu.memory_space<vmem>>, vector<1x1x64xf32>
    %259 = vector.shape_cast %258 : vector<1x1x64xf32> to vector<1x64xf32>
    %260 = vector.broadcast %259 : vector<1x64xf32> to vector<16x64xf32>
    %261 = arith.addf %257, %260 : vector<16x64xf32>
    %cst_120 = arith.constant 5.000000e-01 : f32
    %262 = vector.broadcast %cst_120 : f32 to vector<16x64xf32>
    %263 = arith.mulf %262, %261 : vector<16x64xf32>
    %cst_121 = arith.constant 0.707106769 : f32
    %264 = vector.broadcast %cst_121 : f32 to vector<16x64xf32>
    %265 = arith.mulf %261, %264 : vector<16x64xf32>
    %cst_122 = arith.constant 0.000000e+00 : f32
    %266 = vector.broadcast %cst_122 : f32 to vector<16x64xf32>
    %267 = arith.cmpf oge, %265, %266 : vector<16x64xf32>
    %cst_123 = arith.constant 1.000000e+00 : f32
    %cst_124 = arith.constant -1.000000e+00 : f32
    %268 = vector.broadcast %cst_123 : f32 to vector<16x64xf32>
    %269 = vector.broadcast %cst_124 : f32 to vector<16x64xf32>
    %270 = arith.select %267, %268, %269 : vector<16x64xi1>, vector<16x64xf32>
    %271 = math.absf %265 : vector<16x64xf32>
    %cst_125 = arith.constant 0.327591091 : f32
    %272 = vector.broadcast %cst_125 : f32 to vector<16x64xf32>
    %273 = arith.mulf %272, %271 : vector<16x64xf32>
    %cst_126 = arith.constant 1.000000e+00 : f32
    %274 = vector.broadcast %cst_126 : f32 to vector<16x64xf32>
    %275 = arith.addf %274, %273 : vector<16x64xf32>
    %cst_127 = arith.constant 1.000000e+00 : f32
    %276 = vector.broadcast %cst_127 : f32 to vector<16x64xf32>
    %277 = arith.divf %276, %275 : vector<16x64xf32>
    %cst_128 = arith.constant 1.06140542 : f32
    %278 = vector.broadcast %cst_128 : f32 to vector<16x64xf32>
    %279 = arith.mulf %278, %277 : vector<16x64xf32>
    %cst_129 = arith.constant -1.45315206 : f32
    %280 = vector.broadcast %cst_129 : f32 to vector<16x64xf32>
    %281 = arith.addf %279, %280 : vector<16x64xf32>
    %282 = arith.mulf %281, %277 : vector<16x64xf32>
    %cst_130 = arith.constant 1.42141378 : f32
    %283 = vector.broadcast %cst_130 : f32 to vector<16x64xf32>
    %284 = arith.addf %282, %283 : vector<16x64xf32>
    %285 = arith.mulf %284, %277 : vector<16x64xf32>
    %cst_131 = arith.constant -0.284496725 : f32
    %286 = vector.broadcast %cst_131 : f32 to vector<16x64xf32>
    %287 = arith.addf %285, %286 : vector<16x64xf32>
    %288 = arith.mulf %287, %277 : vector<16x64xf32>
    %cst_132 = arith.constant 0.254829586 : f32
    %289 = vector.broadcast %cst_132 : f32 to vector<16x64xf32>
    %290 = arith.addf %288, %289 : vector<16x64xf32>
    %291 = arith.mulf %290, %277 : vector<16x64xf32>
    %cst_133 = arith.constant 0.000000e+00 : f32
    %292 = vector.broadcast %cst_133 : f32 to vector<16x64xf32>
    %293 = arith.subf %292, %271 : vector<16x64xf32>
    %294 = arith.mulf %293, %271 : vector<16x64xf32>
    %295 = math.exp %294 : vector<16x64xf32>
    %296 = arith.mulf %291, %295 : vector<16x64xf32>
    %cst_134 = arith.constant 1.000000e+00 : f32
    %297 = vector.broadcast %cst_134 : f32 to vector<16x64xf32>
    %298 = arith.subf %297, %296 : vector<16x64xf32>
    %299 = arith.mulf %270, %298 : vector<16x64xf32>
    %cst_135 = arith.constant 1.000000e+00 : f32
    %300 = vector.broadcast %cst_135 : f32 to vector<16x64xf32>
    %301 = arith.addf %300, %299 : vector<16x64xf32>
    %302 = arith.mulf %263, %301 : vector<16x64xf32>
    %c1_136 = arith.constant 1 : index
    %c0_137 = arith.constant 0 : index
    %c0_138 = arith.constant 0 : index
    %303 = vector.load %arg12[%c1_136, %c0_137, %c0_138] : memref<2x64x32xf32, #tpu.memory_space<vmem>>, vector<1x64x32xf32>
    %304 = vector.shape_cast %303 : vector<1x64x32xf32> to vector<64x32xf32>
    %cst_139 = arith.constant dense<0.000000e+00> : vector<16x32xf32>
    %305 = tpu.matmul %302, %304, %cst_139 {dimension_numbers = #tpu.dot_dimension_numbers<[1], [0], [0], [1], [0, 0, 1, 1], [], []>} : vector<16x64xf32>, vector<64x32xf32>, vector<16x32xf32> -> vector<16x32xf32>
    %c1_140 = arith.constant 1 : index
    %c0_141 = arith.constant 0 : index
    %c0_142 = arith.constant 0 : index
    %306 = vector.load %arg13[%c1_140, %c0_141, %c0_142] : memref<2x1x32xf32, #tpu.memory_space<vmem>>, vector<1x1x32xf32>
    %307 = vector.shape_cast %306 : vector<1x1x32xf32> to vector<1x32xf32>
    %308 = vector.broadcast %307 : vector<1x32xf32> to vector<16x32xf32>
    %309 = arith.addf %305, %308 : vector<16x32xf32>
    %310 = arith.addf %228, %309 : vector<16x32xf32>
    %c0_143 = arith.constant 0 : index
    %c0_144 = arith.constant 0 : index
    %c0_145 = arith.constant 0 : index
    %311 = vector.load %arg14[%c0_143, %c0_144, %c0_145] : memref<1x1x32xf32, #tpu.memory_space<vmem>>, vector<1x1x32xf32>
    %312 = vector.shape_cast %311 : vector<1x1x32xf32> to vector<1x32xf32>
    %c0_146 = arith.constant 0 : index
    %c0_147 = arith.constant 0 : index
    %c0_148 = arith.constant 0 : index
    %313 = vector.load %arg15[%c0_146, %c0_147, %c0_148] : memref<1x1x32xf32, #tpu.memory_space<vmem>>, vector<1x1x32xf32>
    %314 = vector.shape_cast %313 : vector<1x1x32xf32> to vector<1x32xf32>
    %cst_149 = arith.constant dense<0.000000e+00> : vector<16xf32>
    %315 = vector.multi_reduction <add>, %310, %cst_149 [1] : vector<16x32xf32> to vector<16xf32>
    %316 = vector.shape_cast %315 : vector<16xf32> to vector<16x1xf32>
    %cst_150 = arith.constant 3.200000e+01 : f32
    %317 = vector.broadcast %cst_150 : f32 to vector<16x1xf32>
    %318 = arith.divf %316, %317 : vector<16x1xf32>
    %319 = vector.broadcast %318 : vector<16x1xf32> to vector<16x32xf32>
    %320 = arith.subf %310, %319 : vector<16x32xf32>
    %321 = arith.mulf %320, %320 : vector<16x32xf32>
    %cst_151 = arith.constant dense<0.000000e+00> : vector<16xf32>
    %322 = vector.multi_reduction <add>, %321, %cst_151 [1] : vector<16x32xf32> to vector<16xf32>
    %323 = vector.shape_cast %322 : vector<16xf32> to vector<16x1xf32>
    %cst_152 = arith.constant 3.200000e+01 : f32
    %324 = vector.broadcast %cst_152 : f32 to vector<16x1xf32>
    %325 = arith.divf %323, %324 : vector<16x1xf32>
    %326 = vector.broadcast %318 : vector<16x1xf32> to vector<16x32xf32>
    %327 = arith.subf %310, %326 : vector<16x32xf32>
    %cst_153 = arith.constant 9.99999974E-6 : f32
    %328 = vector.broadcast %cst_153 : f32 to vector<16x1xf32>
    %329 = arith.addf %325, %328 : vector<16x1xf32>
    %330 = math.rsqrt %329 : vector<16x1xf32>
    %331 = vector.broadcast %330 : vector<16x1xf32> to vector<16x32xf32>
    %332 = arith.mulf %327, %331 : vector<16x32xf32>
    %333 = vector.broadcast %312 : vector<1x32xf32> to vector<16x32xf32>
    %334 = arith.mulf %332, %333 : vector<16x32xf32>
    %335 = vector.broadcast %314 : vector<1x32xf32> to vector<16x32xf32>
    %336 = arith.addf %334, %335 : vector<16x32xf32>
    %c0_154 = arith.constant 0 : index
    %c0_155 = arith.constant 0 : index
    %337 = vector.load %arg16[%c0_154, %c0_155] : memref<16x32xf32, #tpu.memory_space<vmem>>, vector<16x32xf32>
    tpu.vector_store %arg16[%c0_154, %c0_155], %336 {strides = array<i32>} : memref<16x32xf32, #tpu.memory_space<vmem>>, vector<16x32xf32>,
    return
  }
  func.func @transform_0(%arg0: i32) -> (i32, i32) {
    %c0_i32 = arith.constant 0 : i32
    %c0_i32_0 = arith.constant 0 : i32
    %c0_i32_1 = arith.constant 0 : i32
    return %c0_i32, %c0_i32_0 : i32, i32
  }
  func.func @transform_1(%arg0: i32) -> (i32, i32) {
    %c0_i32 = arith.constant 0 : i32
    %c0_i32_0 = arith.constant 0 : i32
    %c0_i32_1 = arith.constant 0 : i32
    return %c0_i32, %c0_i32_0 : i32, i32
  }
  func.func @transform_2(%arg0: i32) -> (i32, i32, i32) {
    %c0_i32 = arith.constant 0 : i32
    %c0_i32_0 = arith.constant 0 : i32
    %c0_i32_1 = arith.constant 0 : i32
    %c0_i32_2 = arith.constant 0 : i32
    return %c0_i32, %c0_i32_0, %c0_i32_1 : i32, i32, i32
  }
  func.func @transform_3(%arg0: i32) -> (i32, i32, i32) {
    %c0_i32 = arith.constant 0 : i32
    %c0_i32_0 = arith.constant 0 : i32
    %c0_i32_1 = arith.constant 0 : i32
    %c0_i32_2 = arith.constant 0 : i32
    return %c0_i32, %c0_i32_0, %c0_i32_1 : i32, i32, i32
  }
  func.func @transform_4(%arg0: i32) -> (i32, i32, i32) {
    %c0_i32 = arith.constant 0 : i32
    %c0_i32_0 = arith.constant 0 : i32
    %c0_i32_1 = arith.constant 0 : i32
    %c0_i32_2 = arith.constant 0 : i32
    return %c0_i32, %c0_i32_0, %c0_i32_1 : i32, i32, i32
  }
  func.func @transform_5(%arg0: i32) -> (i32, i32, i32) {
    %c0_i32 = arith.constant 0 : i32
    %c0_i32_0 = arith.constant 0 : i32
    %c0_i32_1 = arith.constant 0 : i32
    %c0_i32_2 = arith.constant 0 : i32
    return %c0_i32, %c0_i32_0, %c0_i32_1 : i32, i32, i32
  }
  func.func @transform_6(%arg0: i32) -> (i32, i32, i32) {
    %c0_i32 = arith.constant 0 : i32
    %c0_i32_0 = arith.constant 0 : i32
    %c0_i32_1 = arith.constant 0 : i32
    %c0_i32_2 = arith.constant 0 : i32
    return %c0_i32, %c0_i32_0, %c0_i32_1 : i32, i32, i32
  }
  func.func @transform_7(%arg0: i32) -> (i32, i32, i32) {
    %c0_i32 = arith.constant 0 : i32
    %c0_i32_0 = arith.constant 0 : i32
    %c0_i32_1 = arith.constant 0 : i32
    %c0_i32_2 = arith.constant 0 : i32
    return %c0_i32, %c0_i32_0, %c0_i32_1 : i32, i32, i32
  }
  func.func @transform_8(%arg0: i32) -> (i32, i32, i32) {
    %c0_i32 = arith.constant 0 : i32
    %c0_i32_0 = arith.constant 0 : i32
    %c0_i32_1 = arith.constant 0 : i32
    %c0_i32_2 = arith.constant 0 : i32
    return %c0_i32, %c0_i32_0, %c0_i32_1 : i32, i32, i32
  }
  func.func @transform_9(%arg0: i32) -> (i32, i32, i32) {
    %c0_i32 = arith.constant 0 : i32
    %c0_i32_0 = arith.constant 0 : i32
    %c0_i32_1 = arith.constant 0 : i32
    %c0_i32_2 = arith.constant 0 : i32
    return %c0_i32, %c0_i32_0, %c0_i32_1 : i32, i32, i32
  }
  func.func @transform_10(%arg0: i32) -> (i32, i32, i32) {
    %c0_i32 = arith.constant 0 : i32
    %c0_i32_0 = arith.constant 0 : i32
    %c0_i32_1 = arith.constant 0 : i32
    %c0_i32_2 = arith.constant 0 : i32
    return %c0_i32, %c0_i32_0, %c0_i32_1 : i32, i32, i32
  }
  func.func @transform_11(%arg0: i32) -> (i32, i32, i32) {
    %c0_i32 = arith.constant 0 : i32
    %c0_i32_0 = arith.constant 0 : i32
    %c0_i32_1 = arith.constant 0 : i32
    %c0_i32_2 = arith.constant 0 : i32
    return %c0_i32, %c0_i32_0, %c0_i32_1 : i32, i32, i32
  }
  func.func @transform_12(%arg0: i32) -> (i32, i32, i32) {
    %c0_i32 = arith.constant 0 : i32
    %c0_i32_0 = arith.constant 0 : i32
    %c0_i32_1 = arith.constant 0 : i32
    %c0_i32_2 = arith.constant 0 : i32
    return %c0_i32, %c0_i32_0, %c0_i32_1 : i32, i32, i32
  }
  func.func @transform_13(%arg0: i32) -> (i32, i32, i32) {
    %c0_i32 = arith.constant 0 : i32
    %c0_i32_0 = arith.constant 0 : i32
    %c0_i32_1 = arith.constant 0 : i32
    %c0_i32_2 = arith.constant 0 : i32
    return %c0_i32, %c0_i32_0, %c0_i32_1 : i32, i32, i32
  }
  func.func @transform_14(%arg0: i32) -> (i32, i32, i32) {
    %c0_i32 = arith.constant 0 : i32
    %c0_i32_0 = arith.constant 0 : i32
    %c0_i32_1 = arith.constant 0 : i32
    %c0_i32_2 = arith.constant 0 : i32
    return %c0_i32, %c0_i32_0, %c0_i32_1 : i32, i32, i32
  }
  func.func @transform_15(%arg0: i32) -> (i32, i32) {
    %c0_i32 = arith.constant 0 : i32
    %c0_i32_0 = arith.constant 0 : i32
    %c0_i32_1 = arith.constant 0 : i32
    return %c0_i32, %c0_i32_0 : i32, i32
  }
}

</mosaic_0001>

<llo_original>
// kernel: tpu_custom_call.1
$region0: #{tpu_custom_call.1}
  #allocation0 [shape = 'u32[]', space=smem, size = 0x4, offset = 0x4, fixed_abs, tag = 'smem constant byte address 0x4 - core index']
  #allocation1 [shape = 'u32[72,128]{1,0:T(1,128)}', space=vmem, size = 0x9000, scoped, tag = 'internal scratch']
  %s0 = inlined_call_operand.hbm [shape: f32[16,32], index: 0, kind: input, shape index: {}]
  %s1 = inlined_call_operand.hbm [shape: f32[8,32], index: 1, kind: input, shape index: {}]
  %s2 = inlined_call_operand.hbm [shape: f32[2,1,32], index: 2, kind: input, shape index: {}]
  %s3 = inlined_call_operand.vmem [shape: f32[2,1,32], index: 3, kind: input, shape index: {}]
  %s4 = inlined_call_operand.vmem [shape: f32[2,32,96], index: 4, kind: input, shape index: {}]
  %s5 = inlined_call_operand.vmem [shape: f32[2,32,32], index: 5, kind: input, shape index: {}]
  %s6 = inlined_call_operand.vmem [shape: f32[2,1,32], index: 6, kind: input, shape index: {}]
  %s7 = inlined_call_operand.hbm [shape: f32[2,1,32], index: 7, kind: input, shape index: {}]
  %s8 = inlined_call_operand.hbm [shape: f32[2,1,32], index: 8, kind: input, shape index: {}]
  %s9 = inlined_call_operand.vmem [shape: f32[2,32,64], index: 9, kind: input, shape index: {}]
  %s10 = inlined_call_operand.vmem [shape: f32[2,1,64], index: 10, kind: input, shape index: {}]
  %s11 = inlined_call_operand.vmem [shape: f32[2,64,32], index: 11, kind: input, shape index: {}]
  %s12 = inlined_call_operand.vmem [shape: f32[2,1,32], index: 12, kind: input, shape index: {}]
  %s13 = inlined_call_operand.vmem [shape: f32[1,1,32], index: 13, kind: input, shape index: {}]
  %s14 = inlined_call_operand.vmem [shape: f32[1,1,32], index: 14, kind: input, shape index: {}]
  %s15 = inlined_call_operand.hbm [shape: f32[16,32], index: 15, kind: output, shape index: {}]
  %s16 = sld [smem:[#allocation0]]
  $region90: #{tpu_custom_call.1} parent=0
    _
  %s18 = ssub.s32 1, %s16
  %s19 = scalar_select 0, %s18, %s16
  $region1: #{tpu_custom_call.1} parent=0
    #allocation2 [shape = 'u8[8192]{0}', space=vmem, size = 0x2000, scoped, tag = 'input window, operand 0, single buffered']
    #allocation3 [shape = 's32[1]{0}', space=sflag, size = 0x4, scoped, tag = 'scoped memory for tpu_custom_call.1']
    #allocation4 [shape = 's32[1]{0}', space=sflag, size = 0x4, scoped, tag = 'scoped memory for tpu_custom_call.1']
    #allocation5 [shape = 'u8[4096]{0}', space=vmem, size = 0x1000, scoped, tag = 'input window, operand 1, single buffered']
    #allocation6 [shape = 's32[1]{0}', space=sflag, size = 0x4, scoped, tag = 'scoped memory for tpu_custom_call.1']
    #allocation7 [shape = 'u8[1024]{0}', space=vmem, size = 0x400, scoped, tag = 'input window, operand 2, single buffered']
    #allocation8 [shape = 'u8[1024]{0}', space=vmem, size = 0x400, scoped, tag = 'input window, operand 7, single buffered']
    #allocation9 [shape = 's32[1]{0}', space=sflag, size = 0x4, scoped, tag = 'scoped memory for tpu_custom_call.1']
    #allocation10 [shape = 'u8[1024]{0}', space=vmem, size = 0x400, scoped, tag = 'input window, operand 8, single buffered']
    #allocation11 [shape = 'u8[8192]{0}', space=vmem, size = 0x2000, scoped, tag = 'output window, operand 0, single buffered']
    %20 = vsyncpa [#allocation3], 0
    %21 = vsyncpa [#allocation6], 0
    %22 = vsyncpa [#allocation9], 0
    %23 = vsyncpa [#allocation4], 0
    // Predicated region
    $region2: #{tpu_custom_call.1} parent=1 // pred_check
      _
    $region3: #{tpu_custom_call.1} parent=1 // pred_check_branch
      %25 = sbr.rel (0) target = $region5
    $region4: #{tpu_custom_call.1} parent=1 // pred_region
      %27 = vsyncadd [#allocation3], 0
      %s28 = sshll.u32 %s0, 4
      %s29 = int_to_ptr.hbm [resolvable:$true] %s28
      %s30 = sshll.u32 [#allocation2], 4
      %s31 = int_to_ptr.vmem [resolvable:$true] %s30
      %36 = dma.hbm_to_vmem [thread:$0]  %s29, 256, %s31, [#allocation3], 128, 128, 8
    $region5: #{tpu_custom_call.1} parent=1 // pred_fallthru
      _
    // Predicated region
    $region6: #{tpu_custom_call.1} parent=1 // pred_check
      _
    $region7: #{tpu_custom_call.1} parent=1 // pred_check_branch
      %38 = sbr.rel (0) target = $region9
    $region8: #{tpu_custom_call.1} parent=1 // pred_region
      %40 = vsyncadd [#allocation6], 0
      %s42 = sshll.u32 %s1, 4
      %s43 = int_to_ptr.hbm [resolvable:$true] %s42
      %s44 = sshll.u32 [#allocation5], 4
      %s45 = int_to_ptr.vmem [resolvable:$true] %s44
      %47 = dma.hbm_to_vmem [thread:$0]  %s43, 128, %s45, [#allocation6]
    $region9: #{tpu_custom_call.1} parent=1 // pred_fallthru
      _
    // Predicated region
    $region10: #{tpu_custom_call.1} parent=1 // pred_check
      _
    $region11: #{tpu_custom_call.1} parent=1 // pred_check_branch
      %49 = sbr.rel (0) target = $region13
    $region12: #{tpu_custom_call.1} parent=1 // pred_region
      %51 = vsyncadd [#allocation6], 0
      %s52 = sshll.u32 %s2, 4
      %s53 = int_to_ptr.hbm [resolvable:$true] %s52
      %s54 = sshll.u32 [#allocation7], 4
      %s55 = int_to_ptr.vmem [resolvable:$true] %s54
      %60 = dma.hbm_to_vmem [thread:$0]  %s53, 32, %s55, [#allocation6], 16, 16, 1
    $region13: #{tpu_custom_call.1} parent=1 // pred_fallthru
      _
    // Predicated region
    $region14: #{tpu_custom_call.1} parent=1 // pred_check
      _
    $region15: #{tpu_custom_call.1} parent=1 // pred_check_branch
      %62 = sbr.rel (0) target = $region17
    $region16: #{tpu_custom_call.1} parent=1 // pred_region
      _
    $region17: #{tpu_custom_call.1} parent=1 // pred_fallthru
      _
    // Predicated region
    $region18: #{tpu_custom_call.1} parent=1 // pred_check
      _
    $region19: #{tpu_custom_call.1} parent=1 // pred_check_branch
      %64 = sbr.rel (0) target = $region21
    $region20: #{tpu_custom_call.1} parent=1 // pred_region
      _
    $region21: #{tpu_custom_call.1} parent=1 // pred_fallthru
      _
    // Predicated region
    $region22: #{tpu_custom_call.1} parent=1 // pred_check
      _
    $region23: #{tpu_custom_call.1} parent=1 // pred_check_branch
      %66 = sbr.rel (0) target = $region25
    $region24: #{tpu_custom_call.1} parent=1 // pred_region
      _
    $region25: #{tpu_custom_call.1} parent=1 // pred_fallthru
      _
    // Predicated region
    $region26: #{tpu_custom_call.1} parent=1 // pred_check
      _
    $region27: #{tpu_custom_call.1} parent=1 // pred_check_branch
      %68 = sbr.rel (0) target = $region29
    $region28: #{tpu_custom_call.1} parent=1 // pred_region
      _
    $region29: #{tpu_custom_call.1} parent=1 // pred_fallthru
      _
    // Predicated region
    $region30: #{tpu_custom_call.1} parent=1 // pred_check
      _
    $region31: #{tpu_custom_call.1} parent=1 // pred_check_branch
      %70 = sbr.rel (0) target = $region33
    $region32: #{tpu_custom_call.1} parent=1 // pred_region
      %72 = vsyncadd [#allocation9], 0
      %s73 = sshll.u32 %s7, 4
      %s74 = int_to_ptr.hbm [resolvable:$true] %s73
      %s75 = sshll.u32 [#allocation8], 4
      %s76 = int_to_ptr.vmem [resolvable:$true] %s75
      %81 = dma.hbm_to_vmem [thread:$0]  %s74, 32, %s76, [#allocation9], 16, 16, 1
    $region33: #{tpu_custom_call.1} parent=1 // pred_fallthru
      _
    // Predicated region
    $region34: #{tpu_custom_call.1} parent=1 // pred_check
      _
    $region35: #{tpu_custom_call.1} parent=1 // pred_check_branch
      %83 = sbr.rel (0) target = $region37
    $region36: #{tpu_custom_call.1} parent=1 // pred_region
      %85 = vsyncadd [#allocation9], 0
      %s86 = sshll.u32 %s8, 4
      %s87 = int_to_ptr.hbm [resolvable:$true] %s86
      %s88 = sshll.u32 [#allocation10], 4
      %s89 = int_to_ptr.vmem [resolvable:$true] %s88
      %94 = dma.hbm_to_vmem [thread:$0]  %s87, 32, %s89, [#allocation9], 16, 16, 1
    $region37: #{tpu_custom_call.1} parent=1 // pred_fallthru
      _
    // Predicated region
    $region38: #{tpu_custom_call.1} parent=1 // pred_check
      _
    $region39: #{tpu_custom_call.1} parent=1 // pred_check_branch
      %96 = sbr.rel (0) target = $region41
    $region40: #{tpu_custom_call.1} parent=1 // pred_region
      _
    $region41: #{tpu_custom_call.1} parent=1 // pred_fallthru
      _
    // Predicated region
    $region42: #{tpu_custom_call.1} parent=1 // pred_check
      _
    $region43: #{tpu_custom_call.1} parent=1 // pred_check_branch
      %98 = sbr.rel (0) target = $region45
    $region44: #{tpu_custom_call.1} parent=1 // pred_region
      _
    $region45: #{tpu_custom_call.1} parent=1 // pred_fallthru
      _
    // Predicated region
    $region46: #{tpu_custom_call.1} parent=1 // pred_check
      _
    $region47: #{tpu_custom_call.1} parent=1 // pred_check_branch
      %100 = sbr.rel (0) target = $region49
    $region48: #{tpu_custom_call.1} parent=1 // pred_region
      _
    $region49: #{tpu_custom_call.1} parent=1 // pred_fallthru
      _
    // Predicated region
    $region50: #{tpu_custom_call.1} parent=1 // pred_check
      _
    $region51: #{tpu_custom_call.1} parent=1 // pred_check_branch
      %102 = sbr.rel (0) target = $region53
    $region52: #{tpu_custom_call.1} parent=1 // pred_region
      _
    $region53: #{tpu_custom_call.1} parent=1 // pred_fallthru
      _
    // Predicated region
    $region54: #{tpu_custom_call.1} parent=1 // pred_check
      _
    $region55: #{tpu_custom_call.1} parent=1 // pred_check_branch
      %104 = sbr.rel (0) target = $region57
    $region56: #{tpu_custom_call.1} parent=1 // pred_region
      _
    $region57: #{tpu_custom_call.1} parent=1 // pred_fallthru
      _
    // Predicated region
    $region58: #{tpu_custom_call.1} parent=1 // pred_check
      _
    $region59: #{tpu_custom_call.1} parent=1 // pred_check_branch
      %106 = sbr.rel (0) target = $region61
    $region60: #{tpu_custom_call.1} parent=1 // pred_region
      _
    $region61: #{tpu_custom_call.1} parent=1 // pred_fallthru
      _
    // Predicated region
    $region62: #{tpu_custom_call.1} parent=1 // pred_check
      _
    $region63: #{tpu_custom_call.1} parent=1 // pred_check_branch
      %108 = sbr.rel (0) target = $region65
    $region64: #{tpu_custom_call.1} parent=1 // pred_region
      %110 = dma.done [#allocation3], 256
    $region65: #{tpu_custom_call.1} parent=1 // pred_fallthru
      _
    // Predicated region
    $region66: #{tpu_custom_call.1} parent=1 // pred_check
      _
    $region67: #{tpu_custom_call.1} parent=1 // pred_check_branch
      %112 = sbr.rel (0) target = $region69
    $region68: #{tpu_custom_call.1} parent=1 // pred_region
      %114 = dma.done [#allocation6], 128
    $region69: #{tpu_custom_call.1} parent=1 // pred_fallthru
      _
    // Predicated region
    $region70: #{tpu_custom_call.1} parent=1 // pred_check
      _
    $region71: #{tpu_custom_call.1} parent=1 // pred_check_branch
      %116 = sbr.rel (0) target = $region73
    $region72: #{tpu_custom_call.1} parent=1 // pred_region
      %118 = dma.done [#allocation6], 32
    $region73: #{tpu_custom_call.1} parent=1 // pred_fallthru
      _
    // Predicated region
    $region74: #{tpu_custom_call.1} parent=1 // pred_check
      _
    $region75: #{tpu_custom_call.1} parent=1 // pred_check_branch
      %120 = sbr.rel (0) target = $region77
    $region76: #{tpu_custom_call.1} parent=1 // pred_region
      %122 = dma.done [#allocation9], 32
    $region77: #{tpu_custom_call.1} parent=1 // pred_fallthru
      _
    // Predicated region
    $region78: #{tpu_custom_call.1} parent=1 // pred_check
      _
    $region79: #{tpu_custom_call.1} parent=1 // pred_check_branch
      %124 = sbr.rel (0) target = $region81
    $region80: #{tpu_custom_call.1} parent=1 // pred_region
      %126 = dma.done [#allocation9], 32
    $region81: #{tpu_custom_call.1} parent=1 // pred_fallthru
      _
    %v127 = vlaneseq
    %v128 = vshrl.u32 %v127, 7
    %v129 = vadd.s32 %v128, 8
    %v130 = vadd.s32 %v128, 16
    %v131 = vadd.s32 %v128, 24
    %v132 = vadd.s32 %v128, 32
    %v133 = vadd.s32 %v128, 40
    %v134 = vadd.s32 %v128, 48
    %v135 = vadd.s32 %v128, 56
    %v136 = vlaneseq
    %v137 = vand.u32 %v136, 127
    %v138 = vshra.s32 %v128, 4
    %v139 = vshra.s32 %v129, 4
    %v140 = vshra.s32 %v130, 4
    %v141 = vshra.s32 %v131, 4
    %v142 = vshra.s32 %v132, 4
    %v143 = vshra.s32 %v133, 4
    %v144 = vshra.s32 %v134, 4
    %v145 = vshra.s32 %v135, 4
    %v146 = vshra.s32 %v137, 3
    %vm147 = vcmp.eq.s32.totalorder %v138, %v146
    %vm148 = vcmp.eq.s32.totalorder %v139, %v146
    %vm149 = vcmp.eq.s32.totalorder %v140, %v146
    %vm150 = vcmp.eq.s32.totalorder %v141, %v146
    %vm151 = vcmp.eq.s32.totalorder %v142, %v146
    %vm152 = vcmp.eq.s32.totalorder %v143, %v146
    %vm153 = vcmp.eq.s32.totalorder %v144, %v146
    %vm154 = vcmp.eq.s32.totalorder %v145, %v146
    %v155 = vsel %vm147, 1, 0
    %v156 = vsel %vm148, 1, 0
    %v157 = vsel %vm149, 1, 0
    %v158 = vsel %vm150, 1, 0
    %v159 = vsel %vm151, 1, 0
    %v160 = vsel %vm152, 1, 0
    %v161 = vsel %vm153, 1, 0
    %v162 = vsel %vm154, 1, 0
    %v163 = vcvt.s32.f32 %v155
    %v164 = vcvt.s32.f32 %v156
    %v165 = vcvt.s32.f32 %v157
    %v166 = vcvt.s32.f32 %v158
    %v167 = vcvt.s32.f32 %v159
    %v168 = vcvt.s32.f32 %v160
    %v169 = vcvt.s32.f32 %v161
    %v170 = vcvt.s32.f32 %v162
    %v171 = vshra.s32 %v128, 3
    %v172 = vshra.s32 %v129, 3
    %v173 = vand.u32 %v137, 15
    %v174 = vshra.s32 %v173, 3
    %vm175 = vcmp.eq.s32.totalorder %v171, %v174
    %vm176 = vcmp.eq.s32.totalorder %v172, %v174
    %v177 = vshra.s32 %v137, 4
    %vm178 = vcmp.eq.s32.totalorder %v138, %v177
    %vm179 = vcmp.eq.s32.totalorder %v139, %v177
    %vm180 = vcmp.eq.s32.totalorder %v140, %v177
    %vm181 = vcmp.eq.s32.totalorder %v141, %v177
    %vm182 = vcmp.eq.s32.totalorder %v142, %v177
    %vm183 = vcmp.eq.s32.totalorder %v143, %v177
    %vm184 = vcmp.eq.s32.totalorder %v144, %v177
    %vm185 = vcmp.eq.s32.totalorder %v145, %v177
    %v186 = vsel %vm178, 1, 0
    %v187 = vsel %vm179, 1, 0
    %v188 = vsel %vm180, 1, 0
    %v189 = vsel %vm181, 1, 0
    %v190 = vsel %vm182, 1, 0
    %v191 = vsel %vm183, 1, 0
    %v192 = vsel %vm184, 1, 0
    %v193 = vsel %vm185, 1, 0
    %v194 = vcvt.s32.f32 %v186
    %v195 = vcvt.s32.f32 %v187
    %v196 = vcvt.s32.f32 %v188
    %v197 = vcvt.s32.f32 %v189
    %v198 = vcvt.s32.f32 %v190
    %v199 = vcvt.s32.f32 %v191
    %v200 = vcvt.s32.f32 %v192
    %v201 = vcvt.s32.f32 %v193
    %v202 = vld [vmem:[#allocation5] sm:$0xff]
    %v203 = vld [vmem:[#allocation2] sm:$0xff]
    %v204 = vld [vmem:[#allocation2 + $0x8] sm:$0xff]
    %v205 = vadd.f32 %v203, %v202
    %v206 = vadd.f32 %v204, %v202
    %v207 = vld [vmem:[#allocation7] sm:$0x1]
    %v208 = vld [vmem:[%s3] sm:$0x1]
    %vm209 = vcmask 261120
    %v210 = vsel %vm209, %v205, 0.0
    %211 = vadd.xlane.f32.xlu0 %v210
    %v212 = vpop.xlane.xlu0 %211
    %v213 = vsel %vm209, %v206, 0.0
    %214 = vadd.xlane.f32.xlu0 %v213
    %v215 = vpop.xlane.xlu0 %214
    %v216 = vrcp.pop 32.0
    %v217 = vmul.f32 32.0, %v216
    %v218 = vsub.f32 1.0, %v217
    %v219 = vmul.f32 %v216, %v218
    %v220 = vadd.f32 %v216, %v219
    %vm221 = vweird.f32 %v216
    %v222 = vsel %vm221, %v216, %v220
    %v223 = vmul.f32 %v212, %v222
    %v224 = vmul.f32 %v215, %v222
    %v225 = vsub.f32 %v205, %v223
    %v226 = vsub.f32 %v206, %v224
    %v227 = vmul.f32 %v225, %v225
    %v228 = vmul.f32 %v226, %v226
    %v229 = vsel %vm209, %v227, 0.0
    %230 = vadd.xlane.f32.xlu0 %v229
    %v231 = vpop.xlane.xlu0 %230
    %v232 = vsel %vm209, %v228, 0.0
    %233 = vadd.xlane.f32.xlu0 %v232
    %v234 = vpop.xlane.xlu0 %233
    %v235 = vmul.f32 %v231, %v222
    %v236 = vmul.f32 %v234, %v222
    %v237 = vadd.f32 %v235, 1e-05
    %v238 = vadd.f32 %v236, 1e-05
    %v239 = vrsqrt.pop %v237
    %v240 = vmul.f32 %v239, %v237
    %v241 = vmul.f32 %v240, %v239
    %v242 = vmul.f32 0.5, %v241
    %v243 = vsub.f32 1.5, %v242
    %v244 = vmul.f32 %v239, %v243
    %vm245 = vweird.f32 %v237
    %vm246 = vweird.f32 %v239
    %vm247 = vmor %vm245, %vm246
    %v248 = vsel %vm247, %v239, %v244
    %v249 = vrsqrt.pop %v238
    %v250 = vmul.f32 %v249, %v238
    %v251 = vmul.f32 %v250, %v249
    %v252 = vmul.f32 0.5, %v251
    %v253 = vsub.f32 1.5, %v252
    %v254 = vmul.f32 %v249, %v253
    %vm255 = vweird.f32 %v238
    %vm256 = vweird.f32 %v249
    %vm257 = vmor %vm255, %vm256
    %v258 = vsel %vm257, %v249, %v254
    %v259 = vmul.f32 %v225, %v248
    %v260 = vmul.f32 %v226, %v258
    %v262 = vperm.slane %v207, 0
    %v264 = vmul.f32 %v259, %v262
    %v265 = vmul.f32 %v260, %v262
    %v267 = vperm.slane %v208, 0
    %v269 = vadd.f32 %v264, %v267
    %v270 = vadd.f32 %v265, %v267
    %v271 = vld [vmem:[%s4] sm:$0xff]
    %v272 = vld [vmem:[%s4 + $0x8] sm:$0xff]
    %v273 = vld [vmem:[%s4 + $0x10] sm:$0xff]
    %v274 = vld [vmem:[%s4 + $0x18] sm:$0xff]
    %v276 = vsel %vm209, %v269, 0
    %v279 = vsel %vm209, %v270, 0
    %281 = vmatpush.msra.mxu0 0.0
    %282 = vmatpush.msra.mxu0 0.0
    %283 = vmatpush.msra.mxu0 0.0
    %284 = vmatpush.msra.mxu0 0.0
    %285 = vmatpush.msra.mxu0 0.0
    %286 = vmatpush.msra.mxu0 0.0
    %287 = vmatpush.msra.mxu0 0.0
    %288 = vmatpush.msra.mxu0 0.0
    %289 = vmatpush.msra.mxu0 0.0
    %290 = vmatpush.msra.mxu0 0.0
    %291 = vmatpush.msra.mxu0 0.0
    %292 = vmatpush.msra.mxu0 0.0
    %293 = vmatpush.msra.mxu0 %v274
    %294 = vmatpush.msra.mxu0 %v273
    %295 = vmatpush.msra.mxu0 %v272
    %296 = vmatpush.msra.mxu0 %v271
    %297 = vmatmul.f32.gmra.mxu0 %v276
    %v298 = vpop.f32.mrf.mxu0
    %v299 = vadd.f32 0.0, %v298
    %300 = vmatmul.f32.gmra.mxu0 %v279
    %v301 = vpop.f32.mrf.mxu0
    %v302 = vadd.f32 0.0, %v301
    %303 = vdwg.mxu0
    %v304 = vmul.f32 %v299, 0.35355338
    %v305 = vmul.f32 %v302, 0.35355338
    %314 = vrot.lane.b32.xlu0 %v163, 32
    %v315 = vpop.permute.xlu0 %314
    %316 = vrot.lane.b32.xlu0 %v164, 32
    %v317 = vpop.permute.xlu0 %316
    %318 = vrot.lane.b32.xlu0 %v165, 32
    %v319 = vpop.permute.xlu0 %318
    %320 = vrot.lane.b32.xlu0 %v166, 32
    %v321 = vpop.permute.xlu0 %320
    %322 = vrot.lane.b32.xlu0 %v167, 32
    %v323 = vpop.permute.xlu0 %322
    %324 = vrot.lane.b32.xlu0 %v168, 32
    %v325 = vpop.permute.xlu0 %324
    %326 = vrot.lane.b32.xlu0 %v169, 32
    %v327 = vpop.permute.xlu0 %326
    %328 = vrot.lane.b32.xlu0 %v170, 32
    %v329 = vpop.permute.xlu0 %328
    %v338 = vmul.f32 %v299, %v315
    %v339 = vmul.f32 %v302, %v317
    %v340 = vmul.f32 %v299, %v319
    %v341 = vmul.f32 %v302, %v321
    %v342 = vmul.f32 %v299, %v323
    %v343 = vmul.f32 %v302, %v325
    %v344 = vmul.f32 %v299, %v327
    %v345 = vmul.f32 %v302, %v329
    %346 = vrot.lane.b32.xlu0 %v163, 64
    %v347 = vpop.permute.xlu0 %346
    %348 = vrot.lane.b32.xlu0 %v164, 64
    %v349 = vpop.permute.xlu0 %348
    %350 = vrot.lane.b32.xlu0 %v165, 64
    %v351 = vpop.permute.xlu0 %350
    %352 = vrot.lane.b32.xlu0 %v166, 64
    %v353 = vpop.permute.xlu0 %352
    %354 = vrot.lane.b32.xlu0 %v167, 64
    %v355 = vpop.permute.xlu0 %354
    %356 = vrot.lane.b32.xlu0 %v168, 64
    %v357 = vpop.permute.xlu0 %356
    %358 = vrot.lane.b32.xlu0 %v169, 64
    %v359 = vpop.permute.xlu0 %358
    %360 = vrot.lane.b32.xlu0 %v170, 64
    %v361 = vpop.permute.xlu0 %360
    %v370 = vmul.f32 %v299, %v347
    %v371 = vmul.f32 %v302, %v349
    %v372 = vmul.f32 %v299, %v351
    %v373 = vmul.f32 %v302, %v353
    %v374 = vmul.f32 %v299, %v355
    %v375 = vmul.f32 %v302, %v357
    %v376 = vmul.f32 %v299, %v359
    %v377 = vmul.f32 %v302, %v361
    %386 = vrot.lane.b32.xlu0 %v338, 96
    %v387 = vpop.permute.xlu0 %386
    %388 = vrot.lane.b32.xlu0 %v339, 96
    %v389 = vpop.permute.xlu0 %388
    %390 = vrot.lane.b32.xlu0 %v340, 96
    %v391 = vpop.permute.xlu0 %390
    %392 = vrot.lane.b32.xlu0 %v341, 96
    %v393 = vpop.permute.xlu0 %392
    %394 = vrot.lane.b32.xlu0 %v342, 96
    %v395 = vpop.permute.xlu0 %394
    %396 = vrot.lane.b32.xlu0 %v343, 96
    %v397 = vpop.permute.xlu0 %396
    %398 = vrot.lane.b32.xlu0 %v344, 96
    %v399 = vpop.permute.xlu0 %398
    %400 = vrot.lane.b32.xlu0 %v345, 96
    %v401 = vpop.permute.xlu0 %400
    %v403 = vsel %vm209, %v304, 0
    %v406 = vsel %vm209, %v305, 0
    %v408 = vsel %vm209, %v387, 0
    %v410 = vsel %vm209, %v389, 0
    %v412 = vsel %vm209, %v391, 0
    %v414 = vsel %vm209, %v393, 0
    %v416 = vsel %vm209, %v395, 0
    %v418 = vsel %vm209, %v397, 0
    %v420 = vsel %vm209, %v399, 0
    %v422 = vsel %vm209, %v401, 0
    %424 = vmatpush.xpose.msra.mxu0 0.0
    %425 = vmatpush.xpose.msra.mxu0 0.0
    %426 = vmatpush.xpose.msra.mxu0 0.0
    %427 = vmatpush.xpose.msra.mxu0 0.0
    %428 = vmatpush.xpose.msra.mxu0 0.0
    %429 = vmatpush.xpose.msra.mxu0 0.0
    %430 = vmatpush.xpose.msra.mxu0 0.0
    %431 = vmatpush.xpose.msra.mxu0 0.0
    %432 = vmatpush.xpose.msra.mxu0 %v422
    %433 = vmatpush.xpose.msra.mxu0 %v420
    %434 = vmatpush.xpose.msra.mxu0 %v418
    %435 = vmatpush.xpose.msra.mxu0 %v416
    %436 = vmatpush.xpose.msra.mxu0 %v414
    %437 = vmatpush.xpose.msra.mxu0 %v412
    %438 = vmatpush.xpose.msra.mxu0 %v410
    %439 = vmatpush.xpose.msra.mxu0 %v408
    %440 = vmatmul.f32.gmra.mxu0 %v403
    %v441 = vpop.f32.mrf.mxu0
    %v442 = vadd.f32 0.0, %v441
    %443 = vmatmul.f32.gmra.mxu0 %v406
    %v444 = vpop.f32.mrf.mxu0
    %v445 = vadd.f32 0.0, %v444
    %446 = vdwg.mxu0
    %v447 = vsel %vm175, %v442, -1e+30
    %v448 = vsel %vm176, %v445, -1e+30
    %vm449 = vcmask 523264
    %v450 = vsel %vm449, %v447, -inf
    %451 = vmax.xlane.f32.xlu0 %v450
    %v452 = vpop.xlane.xlu0 %451
    %v453 = vsel %vm449, %v448, -inf
    %454 = vmax.xlane.f32.xlu0 %v453
    %v455 = vpop.xlane.xlu0 %454
    %v456 = vsub.f32 %v447, %v452
    %v457 = vsub.f32 %v448, %v455
    %v458 = vmul.f32 %v456, 1.442695
    %v459 = vpow.pop %v458
    %v460 = vmul.f32 %v457, 1.442695
    %v461 = vpow.pop %v460
    %v463 = vsel %vm449, %v459, 0
    %v466 = vsel %vm449, %v461, 0
    %468 = vmatpush.msra.mxu0 0.0
    %469 = vmatpush.msra.mxu0 0.0
    %470 = vmatpush.msra.mxu0 0.0
    %471 = vmatpush.msra.mxu0 0.0
    %472 = vmatpush.msra.mxu0 0.0
    %473 = vmatpush.msra.mxu0 0.0
    %474 = vmatpush.msra.mxu0 0.0
    %475 = vmatpush.msra.mxu0 0.0
    %476 = vmatpush.msra.mxu0 %v201
    %477 = vmatpush.msra.mxu0 %v200
    %478 = vmatpush.msra.mxu0 %v199
    %479 = vmatpush.msra.mxu0 %v198
    %480 = vmatpush.msra.mxu0 %v197
    %481 = vmatpush.msra.mxu0 %v196
    %482 = vmatpush.msra.mxu0 %v195
    %483 = vmatpush.msra.mxu0 %v194
    %484 = vmatmul.f32.gmra.mxu0 %v463
    %v485 = vpop.f32.mrf.mxu0
    %v486 = vadd.f32 0.0, %v485
    %487 = vmatmul.f32.gmra.mxu0 %v466
    %v488 = vpop.f32.mrf.mxu0
    %v489 = vadd.f32 0.0, %v488
    %490 = vdwg.mxu0
    %v491 = vrcp.pop %v486
    %v492 = vrcp.pop %v489
    %v493 = vmul.f32 %v459, %v491
    %v494 = vmul.f32 %v461, %v492
    %503 = vrot.lane.b32.xlu0 %v370, 64
    %v504 = vpop.permute.xlu0 %503
    %505 = vrot.lane.b32.xlu0 %v371, 64
    %v506 = vpop.permute.xlu0 %505
    %507 = vrot.lane.b32.xlu0 %v372, 64
    %v508 = vpop.permute.xlu0 %507
    %509 = vrot.lane.b32.xlu0 %v373, 64
    %v510 = vpop.permute.xlu0 %509
    %511 = vrot.lane.b32.xlu0 %v374, 64
    %v512 = vpop.permute.xlu0 %511
    %513 = vrot.lane.b32.xlu0 %v375, 64
    %v514 = vpop.permute.xlu0 %513
    %515 = vrot.lane.b32.xlu0 %v376, 64
    %v516 = vpop.permute.xlu0 %515
    %517 = vrot.lane.b32.xlu0 %v377, 64
    %v518 = vpop.permute.xlu0 %517
    %v528 = vsel %vm449, %v493, 0
    %v531 = vsel %vm449, %v494, 0
    %533 = vmatpush.msra.mxu0 0.0
    %534 = vmatpush.msra.mxu0 0.0
    %535 = vmatpush.msra.mxu0 0.0
    %536 = vmatpush.msra.mxu0 0.0
    %537 = vmatpush.msra.mxu0 0.0
    %538 = vmatpush.msra.mxu0 0.0
    %539 = vmatpush.msra.mxu0 0.0
    %540 = vmatpush.msra.mxu0 0.0
    %541 = vmatpush.msra.mxu0 %v518
    %542 = vmatpush.msra.mxu0 %v516
    %543 = vmatpush.msra.mxu0 %v514
    %544 = vmatpush.msra.mxu0 %v512
    %545 = vmatpush.msra.mxu0 %v510
    %546 = vmatpush.msra.mxu0 %v508
    %547 = vmatpush.msra.mxu0 %v506
    %548 = vmatpush.msra.mxu0 %v504
    %549 = vmatmul.f32.gmra.mxu0 %v528
    %v550 = vpop.f32.mrf.mxu0
    %v551 = vadd.f32 0.0, %v550
    %552 = vmatmul.f32.gmra.mxu0 %v531
    %v553 = vpop.f32.mrf.mxu0
    %v554 = vadd.f32 0.0, %v553
    %555 = vdwg.mxu0
    %v556 = vld [vmem:[%s5] sm:$0xff]
    %v557 = vld [vmem:[%s5 + $0x8] sm:$0xff]
    %v558 = vld [vmem:[%s5 + $0x10] sm:$0xff]
    %v559 = vld [vmem:[%s5 + $0x18] sm:$0xff]
    %v561 = vsel %vm209, %v551, 0
    %v564 = vsel %vm209, %v554, 0
    %566 = vmatpush.msra.mxu0 0.0
    %567 = vmatpush.msra.mxu0 0.0
    %568 = vmatpush.msra.mxu0 0.0
    %569 = vmatpush.msra.mxu0 0.0
    %570 = vmatpush.msra.mxu0 0.0
    %571 = vmatpush.msra.mxu0 0.0
    %572 = vmatpush.msra.mxu0 0.0
    %573 = vmatpush.msra.mxu0 0.0
    %574 = vmatpush.msra.mxu0 0.0
    %575 = vmatpush.msra.mxu0 0.0
    %576 = vmatpush.msra.mxu0 0.0
    %577 = vmatpush.msra.mxu0 0.0
    %578 = vmatpush.msra.mxu0 %v559
    %579 = vmatpush.msra.mxu0 %v558
    %580 = vmatpush.msra.mxu0 %v557
    %581 = vmatpush.msra.mxu0 %v556
    %582 = vmatmul.f32.gmra.mxu0 %v561
    %v583 = vpop.f32.mrf.mxu0
    %v584 = vadd.f32 0.0, %v583
    %585 = vmatmul.f32.gmra.mxu0 %v564
    %v586 = vpop.f32.mrf.mxu0
    %v587 = vadd.f32 0.0, %v586
    %588 = vdwg.mxu0
    %v589 = vadd.f32 %v205, %v584
    %v590 = vadd.f32 %v206, %v587
    %v591 = vld [vmem:[%s6] sm:$0x1]
    %v593 = vperm.slane %v591, 0
    %v595 = vadd.f32 %v589, %v593
    %v596 = vadd.f32 %v590, %v593
    %v597 = vld [vmem:[#allocation8] sm:$0x1]
    %v598 = vld [vmem:[#allocation10] sm:$0x1]
    %v599 = vsel %vm209, %v595, 0.0
    %600 = vadd.xlane.f32.xlu0 %v599
    %v601 = vpop.xlane.xlu0 %600
    %v602 = vsel %vm209, %v596, 0.0
    %603 = vadd.xlane.f32.xlu0 %v602
    %v604 = vpop.xlane.xlu0 %603
    %v605 = vmul.f32 %v601, %v222
    %v606 = vmul.f32 %v604, %v222
    %v607 = vsub.f32 %v595, %v605
    %v608 = vsub.f32 %v596, %v606
    %v609 = vmul.f32 %v607, %v607
    %v610 = vmul.f32 %v608, %v608
    %v611 = vsel %vm209, %v609, 0.0
    %612 = vadd.xlane.f32.xlu0 %v611
    %v613 = vpop.xlane.xlu0 %612
    %v614 = vsel %vm209, %v610, 0.0
    %615 = vadd.xlane.f32.xlu0 %v614
    %v616 = vpop.xlane.xlu0 %615
    %v617 = vmul.f32 %v613, %v222
    %v618 = vmul.f32 %v616, %v222
    %v619 = vadd.f32 %v617, 1e-05
    %v620 = vadd.f32 %v618, 1e-05
    %v621 = vrsqrt.pop %v619
    %v622 = vmul.f32 %v621, %v619
    %v623 = vmul.f32 %v622, %v621
    %v624 = vmul.f32 0.5, %v623
    %v625 = vsub.f32 1.5, %v624
    %v626 = vmul.f32 %v621, %v625
    %vm627 = vweird.f32 %v619
    %vm628 = vweird.f32 %v621
    %vm629 = vmor %vm627, %vm628
    %v630 = vsel %vm629, %v621, %v626
    %v631 = vrsqrt.pop %v620
    %v632 = vmul.f32 %v631, %v620
    %v633 = vmul.f32 %v632, %v631
    %v634 = vmul.f32 0.5, %v633
    %v635 = vsub.f32 1.5, %v634
    %v636 = vmul.f32 %v631, %v635
    %vm637 = vweird.f32 %v620
    %vm638 = vweird.f32 %v631
    %vm639 = vmor %vm637, %vm638
    %v640 = vsel %vm639, %v631, %v636
    %v641 = vmul.f32 %v607, %v630
    %v642 = vmul.f32 %v608, %v640
    %v644 = vperm.slane %v597, 0
    %v646 = vmul.f32 %v641, %v644
    %v647 = vmul.f32 %v642, %v644
    %v649 = vperm.slane %v598, 0
    %v651 = vadd.f32 %v646, %v649
    %v652 = vadd.f32 %v647, %v649
    %v653 = vld [vmem:[%s9] sm:$0xff]
    %v654 = vld [vmem:[%s9 + $0x8] sm:$0xff]
    %v655 = vld [vmem:[%s9 + $0x10] sm:$0xff]
    %v656 = vld [vmem:[%s9 + $0x18] sm:$0xff]
    %v657 = vld [vmem:[%s10] sm:$0x1]
    %v659 = vperm.slane %v657, 0
    %v662 = vsel %vm209, %v651, 0
    %v665 = vsel %vm209, %v652, 0
    %667 = vmatpush.msra.mxu0 0.0
    %668 = vmatpush.msra.mxu0 0.0
    %669 = vmatpush.msra.mxu0 0.0
    %670 = vmatpush.msra.mxu0 0.0
    %671 = vmatpush.msra.mxu0 0.0
    %672 = vmatpush.msra.mxu0 0.0
    %673 = vmatpush.msra.mxu0 0.0
    %674 = vmatpush.msra.mxu0 0.0
    %675 = vmatpush.msra.mxu0 0.0
    %676 = vmatpush.msra.mxu0 0.0
    %677 = vmatpush.msra.mxu0 0.0
    %678 = vmatpush.msra.mxu0 0.0
    %679 = vmatpush.msra.mxu0 %v656
    %680 = vmatpush.msra.mxu0 %v655
    %681 = vmatpush.msra.mxu0 %v654
    %682 = vmatpush.msra.mxu0 %v653
    %683 = vmatmul.f32.gmra.mxu0 %v662
    %v684 = vpop.f32.mrf.mxu0
    %v685 = vadd.f32 %v659, %v684
    %686 = vmatmul.f32.gmra.mxu0 %v665
    %v687 = vpop.f32.mrf.mxu0
    %v688 = vadd.f32 %v659, %v687
    %689 = vdwg.mxu0
    %v690 = vmul.f32 %v685, 0.5
    %v691 = vmul.f32 %v688, 0.5
    %v692 = vmul.f32 %v685, 0.70710677
    %v693 = vmul.f32 %v688, 0.70710677
    %vm694 = vcmp.ge.f32.partialorder %v692, 0.0
    %vm695 = vcmp.ge.f32.partialorder %v693, 0.0
    %v696 = vsel %vm694, 1.0, -1.0
    %v697 = vsel %vm695, 1.0, -1.0
    %v698 = vand.u32 2147483647, %v692
    %v699 = vand.u32 2147483647, %v693
    %v700 = vmul.f32 %v698, 0.3275911
    %v701 = vmul.f32 %v699, 0.3275911
    %v702 = vadd.f32 %v700, 1.0
    %v703 = vadd.f32 %v701, 1.0
    %v704 = vrcp.pop %v702
    %v705 = vmul.f32 %v702, %v704
    %v706 = vsub.f32 1.0, %v705
    %v707 = vmul.f32 %v704, %v706
    %v708 = vadd.f32 %v704, %v707
    %vm709 = vweird.f32 %v702
    %vm710 = vweird.f32 %v704
    %vm711 = vmor %vm709, %vm710
    %v712 = vsel %vm711, %v704, %v708
    %v713 = vand.u32 2147483647, %v702
    %vm714 = vcmp.eq.f32.partialorder %v713, 8.507059e+37
    %v715 = vand.u32 %v702, 2147483648
    %v716 = vor.u32 1.1754944e-38, %v715
    %v717 = vsel %vm714, %v716, %v712
    %v718 = vmul.f32 1.0, %v717
    %v719 = vrcp.pop %v703
    %v720 = vmul.f32 %v703, %v719
    %v721 = vsub.f32 1.0, %v720
    %v722 = vmul.f32 %v719, %v721
    %v723 = vadd.f32 %v719, %v722
    %vm724 = vweird.f32 %v703
    %vm725 = vweird.f32 %v719
    %vm726 = vmor %vm724, %vm725
    %v727 = vsel %vm726, %v719, %v723
    %v728 = vand.u32 2147483647, %v703
    %vm729 = vcmp.eq.f32.partialorder %v728, 8.507059e+37
    %v730 = vand.u32 %v703, 2147483648
    %v731 = vor.u32 1.1754944e-38, %v730
    %v732 = vsel %vm729, %v731, %v727
    %v733 = vmul.f32 1.0, %v732
    %v734 = vmul.f32 %v718, 1.0614054
    %v735 = vmul.f32 %v733, 1.0614054
    %v736 = vadd.f32 %v734, -1.4531521
    %v737 = vadd.f32 %v735, -1.4531521
    %v738 = vmul.f32 %v736, %v718
    %v739 = vmul.f32 %v737, %v733
    %v740 = vadd.f32 %v738, 1.4214138
    %v741 = vadd.f32 %v739, 1.4214138
    %v742 = vmul.f32 %v740, %v718
    %v743 = vmul.f32 %v741, %v733
    %v744 = vadd.f32 %v742, -0.28449672
    %v745 = vadd.f32 %v743, -0.28449672
    %v746 = vmul.f32 %v744, %v718
    %v747 = vmul.f32 %v745, %v733
    %v748 = vadd.f32 %v746, 0.2548296
    %v749 = vadd.f32 %v747, 0.2548296
    %v750 = vmul.f32 %v748, %v718
    %v751 = vmul.f32 %v749, %v733
    %v752 = vsub.f32 0.0, %v698
    %v753 = vsub.f32 0.0, %v699
    %v754 = vmul.f32 %v752, %v698
    %v755 = vmul.f32 %v753, %v699
    %v756 = vmul.f32 %v754, 1.442695
    %v757 = vpow.pop %v756
    %v758 = vmul.f32 %v755, 1.442695
    %v759 = vpow.pop %v758
    %v760 = vmul.f32 %v750, %v757
    %v761 = vmul.f32 %v751, %v759
    %v762 = vsub.f32 1.0, %v760
    %v763 = vsub.f32 1.0, %v761
    %v764 = vmul.f32 %v696, %v762
    %v765 = vmul.f32 %v697, %v763
    %v766 = vadd.f32 %v764, 1.0
    %v767 = vadd.f32 %v765, 1.0
    %v768 = vmul.f32 %v690, %v766
    %v769 = vmul.f32 %v691, %v767
    %v770 = vld [vmem:[%s11] sm:$0xff]
    %v771 = vld [vmem:[%s11 + $0x8] sm:$0xff]
    %v772 = vld [vmem:[%s11 + $0x10] sm:$0xff]
    %v773 = vld [vmem:[%s11 + $0x18] sm:$0xff]
    %v774 = vld [vmem:[%s11 + $0x20] sm:$0xff]
    %v775 = vld [vmem:[%s11 + $0x28] sm:$0xff]
    %v776 = vld [vmem:[%s11 + $0x30] sm:$0xff]
    %v777 = vld [vmem:[%s11 + $0x38] sm:$0xff]
    %v778 = vld [vmem:[%s12] sm:$0x1]
    %v780 = vperm.slane %v778, 0
    %v783 = vsel %vm449, %v768, 0
    %v786 = vsel %vm449, %v769, 0
    %788 = vmatpush.msra.mxu0 0.0
    %789 = vmatpush.msra.mxu0 0.0
    %790 = vmatpush.msra.mxu0 0.0
    %791 = vmatpush.msra.mxu0 0.0
    %792 = vmatpush.msra.mxu0 0.0
    %793 = vmatpush.msra.mxu0 0.0
    %794 = vmatpush.msra.mxu0 0.0
    %795 = vmatpush.msra.mxu0 0.0
    %796 = vmatpush.msra.mxu0 %v777
    %797 = vmatpush.msra.mxu0 %v776
    %798 = vmatpush.msra.mxu0 %v775
    %799 = vmatpush.msra.mxu0 %v774
    %800 = vmatpush.msra.mxu0 %v773
    %801 = vmatpush.msra.mxu0 %v772
    %802 = vmatpush.msra.mxu0 %v771
    %803 = vmatpush.msra.mxu0 %v770
    %804 = vmatmul.f32.gmra.mxu0 %v783
    %v805 = vpop.f32.mrf.mxu0
    %v806 = vadd.f32 %v780, %v805
    %807 = vmatmul.f32.gmra.mxu0 %v786
    %v808 = vpop.f32.mrf.mxu0
    %v809 = vadd.f32 %v780, %v808
    %810 = vdwg.mxu0
    %v811 = vadd.f32 %v595, %v806
    %v812 = vadd.f32 %v596, %v809
    %s813 = scalar_lea.vmem [#allocation7], 1
    %v814 = vld [vmem:[%s813] sm:$0x1]
    %s815 = scalar_lea.vmem %s3, 1
    %v816 = vld [vmem:[%s815] sm:$0x1]
    %v817 = vsel %vm209, %v811, 0.0
    %818 = vadd.xlane.f32.xlu0 %v817
    %v819 = vpop.xlane.xlu0 %818
    %v820 = vsel %vm209, %v812, 0.0
    %821 = vadd.xlane.f32.xlu0 %v820
    %v822 = vpop.xlane.xlu0 %821
    %v823 = vmul.f32 %v819, %v222
    %v824 = vmul.f32 %v822, %v222
    %v825 = vsub.f32 %v811, %v823
    %v826 = vsub.f32 %v812, %v824
    %v827 = vmul.f32 %v825, %v825
    %v828 = vmul.f32 %v826, %v826
    %v829 = vsel %vm209, %v827, 0.0
    %830 = vadd.xlane.f32.xlu0 %v829
    %v831 = vpop.xlane.xlu0 %830
    %v832 = vsel %vm209, %v828, 0.0
    %833 = vadd.xlane.f32.xlu0 %v832
    %v834 = vpop.xlane.xlu0 %833
    %v835 = vmul.f32 %v831, %v222
    %v836 = vmul.f32 %v834, %v222
    %v837 = vadd.f32 %v835, 1e-05
    %v838 = vadd.f32 %v836, 1e-05
    %v839 = vrsqrt.pop %v837
    %v840 = vmul.f32 %v839, %v837
    %v841 = vmul.f32 %v840, %v839
    %v842 = vmul.f32 0.5, %v841
    %v843 = vsub.f32 1.5, %v842
    %v844 = vmul.f32 %v839, %v843
    %vm845 = vweird.f32 %v837
    %vm846 = vweird.f32 %v839
    %vm847 = vmor %vm845, %vm846
    %v848 = vsel %vm847, %v839, %v844
    %v849 = vrsqrt.pop %v838
    %v850 = vmul.f32 %v849, %v838
    %v851 = vmul.f32 %v850, %v849
    %v852 = vmul.f32 0.5, %v851
    %v853 = vsub.f32 1.5, %v852
    %v854 = vmul.f32 %v849, %v853
    %vm855 = vweird.f32 %v838
    %vm856 = vweird.f32 %v849
    %vm857 = vmor %vm855, %vm856
    %v858 = vsel %vm857, %v849, %v854
    %v859 = vmul.f32 %v825, %v848
    %v860 = vmul.f32 %v826, %v858
    %v862 = vperm.slane %v814, 0
    %v864 = vmul.f32 %v859, %v862
    %v865 = vmul.f32 %v860, %v862
    %v867 = vperm.slane %v816, 0
    %v869 = vadd.f32 %v864, %v867
    %v870 = vadd.f32 %v865, %v867
    %s871 = scalar_lea.vmem %s4, 32
    %v872 = vld [vmem:[%s871] sm:$0xff]
    %v873 = vld [vmem:[%s871 + $0x8] sm:$0xff]
    %v874 = vld [vmem:[%s871 + $0x10] sm:$0xff]
    %v875 = vld [vmem:[%s871 + $0x18] sm:$0xff]
    %v877 = vsel %vm209, %v869, 0
    %v880 = vsel %vm209, %v870, 0
    %882 = vmatpush.msra.mxu0 0.0
    %883 = vmatpush.msra.mxu0 0.0
    %884 = vmatpush.msra.mxu0 0.0
    %885 = vmatpush.msra.mxu0 0.0
    %886 = vmatpush.msra.mxu0 0.0
    %887 = vmatpush.msra.mxu0 0.0
    %888 = vmatpush.msra.mxu0 0.0
    %889 = vmatpush.msra.mxu0 0.0
    %890 = vmatpush.msra.mxu0 0.0
    %891 = vmatpush.msra.mxu0 0.0
    %892 = vmatpush.msra.mxu0 0.0
    %893 = vmatpush.msra.mxu0 0.0
    %894 = vmatpush.msra.mxu0 %v875
    %895 = vmatpush.msra.mxu0 %v874
    %896 = vmatpush.msra.mxu0 %v873
    %897 = vmatpush.msra.mxu0 %v872
    %898 = vmatmul.f32.gmra.mxu0 %v877
    %v899 = vpop.f32.mrf.mxu0
    %v900 = vadd.f32 0.0, %v899
    %901 = vmatmul.f32.gmra.mxu0 %v880
    %v902 = vpop.f32.mrf.mxu0
    %v903 = vadd.f32 0.0, %v902
    %904 = vdwg.mxu0
    %v905 = vmul.f32 %v900, 0.35355338
    %v906 = vmul.f32 %v903, 0.35355338
    %v907 = vmul.f32 %v900, %v315
    %v908 = vmul.f32 %v903, %v317
    %v909 = vmul.f32 %v900, %v319
    %v910 = vmul.f32 %v903, %v321
    %v911 = vmul.f32 %v900, %v323
    %v912 = vmul.f32 %v903, %v325
    %v913 = vmul.f32 %v900, %v327
    %v914 = vmul.f32 %v903, %v329
    %v915 = vmul.f32 %v900, %v347
    %v916 = vmul.f32 %v903, %v349
    %v917 = vmul.f32 %v900, %v351
    %v918 = vmul.f32 %v903, %v353
    %v919 = vmul.f32 %v900, %v355
    %v920 = vmul.f32 %v903, %v357
    %v921 = vmul.f32 %v900, %v359
    %v922 = vmul.f32 %v903, %v361
    %931 = vrot.lane.b32.xlu0 %v907, 96
    %v932 = vpop.permute.xlu0 %931
    %933 = vrot.lane.b32.xlu0 %v908, 96
    %v934 = vpop.permute.xlu0 %933
    %935 = vrot.lane.b32.xlu0 %v909, 96
    %v936 = vpop.permute.xlu0 %935
    %937 = vrot.lane.b32.xlu0 %v910, 96
    %v938 = vpop.permute.xlu0 %937
    %939 = vrot.lane.b32.xlu0 %v911, 96
    %v940 = vpop.permute.xlu0 %939
    %941 = vrot.lane.b32.xlu0 %v912, 96
    %v942 = vpop.permute.xlu0 %941
    %943 = vrot.lane.b32.xlu0 %v913, 96
    %v944 = vpop.permute.xlu0 %943
    %945 = vrot.lane.b32.xlu0 %v914, 96
    %v946 = vpop.permute.xlu0 %945
    %v948 = vsel %vm209, %v905, 0
    %v951 = vsel %vm209, %v906, 0
    %v953 = vsel %vm209, %v932, 0
    %v955 = vsel %vm209, %v934, 0
    %v957 = vsel %vm209, %v936, 0
    %v959 = vsel %vm209, %v938, 0
    %v961 = vsel %vm209, %v940, 0
    %v963 = vsel %vm209, %v942, 0
    %v965 = vsel %vm209, %v944, 0
    %v967 = vsel %vm209, %v946, 0
    %969 = vmatpush.xpose.msra.mxu0 0.0
    %970 = vmatpush.xpose.msra.mxu0 0.0
    %971 = vmatpush.xpose.msra.mxu0 0.0
    %972 = vmatpush.xpose.msra.mxu0 0.0
    %973 = vmatpush.xpose.msra.mxu0 0.0
    %974 = vmatpush.xpose.msra.mxu0 0.0
    %975 = vmatpush.xpose.msra.mxu0 0.0
    %976 = vmatpush.xpose.msra.mxu0 0.0
    %977 = vmatpush.xpose.msra.mxu0 %v967
    %978 = vmatpush.xpose.msra.mxu0 %v965
    %979 = vmatpush.xpose.msra.mxu0 %v963
    %980 = vmatpush.xpose.msra.mxu0 %v961
    %981 = vmatpush.xpose.msra.mxu0 %v959
    %982 = vmatpush.xpose.msra.mxu0 %v957
    %983 = vmatpush.xpose.msra.mxu0 %v955
    %984 = vmatpush.xpose.msra.mxu0 %v953
    %985 = vmatmul.f32.gmra.mxu0 %v948
    %v986 = vpop.f32.mrf.mxu0
    %v987 = vadd.f32 0.0, %v986
    %988 = vmatmul.f32.gmra.mxu0 %v951
    %v989 = vpop.f32.mrf.mxu0
    %v990 = vadd.f32 0.0, %v989
    %991 = vdwg.mxu0
    %v992 = vsel %vm175, %v987, -1e+30
    %v993 = vsel %vm176, %v990, -1e+30
    %v994 = vsel %vm449, %v992, -inf
    %995 = vmax.xlane.f32.xlu0 %v994
    %v996 = vpop.xlane.xlu0 %995
    %v997 = vsel %vm449, %v993, -inf
    %998 = vmax.xlane.f32.xlu0 %v997
    %v999 = vpop.xlane.xlu0 %998
    %v1000 = vsub.f32 %v992, %v996
    %v1001 = vsub.f32 %v993, %v999
    %v1002 = vmul.f32 %v1000, 1.442695
    %v1003 = vpow.pop %v1002
    %v1004 = vmul.f32 %v1001, 1.442695
    %v1005 = vpow.pop %v1004
    %v1007 = vsel %vm449, %v1003, 0
    %v1010 = vsel %vm449, %v1005, 0
    %1012 = vmatpush.msra.mxu0 0.0
    %1013 = vmatpush.msra.mxu0 0.0
    %1014 = vmatpush.msra.mxu0 0.0
    %1015 = vmatpush.msra.mxu0 0.0
    %1016 = vmatpush.msra.mxu0 0.0
    %1017 = vmatpush.msra.mxu0 0.0
    %1018 = vmatpush.msra.mxu0 0.0
    %1019 = vmatpush.msra.mxu0 0.0
    %1020 = vmatpush.msra.mxu0 %v201
    %1021 = vmatpush.msra.mxu0 %v200
    %1022 = vmatpush.msra.mxu0 %v199
    %1023 = vmatpush.msra.mxu0 %v198
    %1024 = vmatpush.msra.mxu0 %v197
    %1025 = vmatpush.msra.mxu0 %v196
    %1026 = vmatpush.msra.mxu0 %v195
    %1027 = vmatpush.msra.mxu0 %v194
    %1028 = vmatmul.f32.gmra.mxu0 %v1007
    %v1029 = vpop.f32.mrf.mxu0
    %v1030 = vadd.f32 0.0, %v1029
    %1031 = vmatmul.f32.gmra.mxu0 %v1010
    %v1032 = vpop.f32.mrf.mxu0
    %v1033 = vadd.f32 0.0, %v1032
    %1034 = vdwg.mxu0
    %v1035 = vrcp.pop %v1030
    %v1036 = vrcp.pop %v1033
    %v1037 = vmul.f32 %v1003, %v1035
    %v1038 = vmul.f32 %v1005, %v1036
    %1047 = vrot.lane.b32.xlu0 %v915, 64
    %v1048 = vpop.permute.xlu0 %1047
    %1049 = vrot.lane.b32.xlu0 %v916, 64
    %v1050 = vpop.permute.xlu0 %1049
    %1051 = vrot.lane.b32.xlu0 %v917, 64
    %v1052 = vpop.permute.xlu0 %1051
    %1053 = vrot.lane.b32.xlu0 %v918, 64
    %v1054 = vpop.permute.xlu0 %1053
    %1055 = vrot.lane.b32.xlu0 %v919, 64
    %v1056 = vpop.permute.xlu0 %1055
    %1057 = vrot.lane.b32.xlu0 %v920, 64
    %v1058 = vpop.permute.xlu0 %1057
    %1059 = vrot.lane.b32.xlu0 %v921, 64
    %v1060 = vpop.permute.xlu0 %1059
    %1061 = vrot.lane.b32.xlu0 %v922, 64
    %v1062 = vpop.permute.xlu0 %1061
    %v1072 = vsel %vm449, %v1037, 0
    %v1075 = vsel %vm449, %v1038, 0
    %1077 = vmatpush.msra.mxu0 0.0
    %1078 = vmatpush.msra.mxu0 0.0
    %1079 = vmatpush.msra.mxu0 0.0
    %1080 = vmatpush.msra.mxu0 0.0
    %1081 = vmatpush.msra.mxu0 0.0
    %1082 = vmatpush.msra.mxu0 0.0
    %1083 = vmatpush.msra.mxu0 0.0
    %1084 = vmatpush.msra.mxu0 0.0
    %1085 = vmatpush.msra.mxu0 %v1062
    %1086 = vmatpush.msra.mxu0 %v1060
    %1087 = vmatpush.msra.mxu0 %v1058
    %1088 = vmatpush.msra.mxu0 %v1056
    %1089 = vmatpush.msra.mxu0 %v1054
    %1090 = vmatpush.msra.mxu0 %v1052
    %1091 = vmatpush.msra.mxu0 %v1050
    %1092 = vmatpush.msra.mxu0 %v1048
    %1093 = vmatmul.f32.gmra.mxu0 %v1072
    %v1094 = vpop.f32.mrf.mxu0
    %v1095 = vadd.f32 0.0, %v1094
    %1096 = vmatmul.f32.gmra.mxu0 %v1075
    %v1097 = vpop.f32.mrf.mxu0
    %v1098 = vadd.f32 0.0, %v1097
    %1099 = vdwg.mxu0
    %s1100 = scalar_lea.vmem %s5, 32
    %v1101 = vld [vmem:[%s1100] sm:$0xff]
    %v1102 = vld [vmem:[%s1100 + $0x8] sm:$0xff]
    %v1103 = vld [vmem:[%s1100 + $0x10] sm:$0xff]
    %v1104 = vld [vmem:[%s1100 + $0x18] sm:$0xff]
    %v1106 = vsel %vm209, %v1095, 0
    %v1109 = vsel %vm209, %v1098, 0
    %1111 = vmatpush.msra.mxu0 0.0
    %1112 = vmatpush.msra.mxu0 0.0
    %1113 = vmatpush.msra.mxu0 0.0
    %1114 = vmatpush.msra.mxu0 0.0
    %1115 = vmatpush.msra.mxu0 0.0
    %1116 = vmatpush.msra.mxu0 0.0
    %1117 = vmatpush.msra.mxu0 0.0
    %1118 = vmatpush.msra.mxu0 0.0
    %1119 = vmatpush.msra.mxu0 0.0
    %1120 = vmatpush.msra.mxu0 0.0
    %1121 = vmatpush.msra.mxu0 0.0
    %1122 = vmatpush.msra.mxu0 0.0
    %1123 = vmatpush.msra.mxu0 %v1104
    %1124 = vmatpush.msra.mxu0 %v1103
    %1125 = vmatpush.msra.mxu0 %v1102
    %1126 = vmatpush.msra.mxu0 %v1101
    %1127 = vmatmul.f32.gmra.mxu0 %v1106
    %v1128 = vpop.f32.mrf.mxu0
    %v1129 = vadd.f32 0.0, %v1128
    %1130 = vmatmul.f32.gmra.mxu0 %v1109
    %v1131 = vpop.f32.mrf.mxu0
    %v1132 = vadd.f32 0.0, %v1131
    %1133 = vdwg.mxu0
    %v1134 = vadd.f32 %v811, %v1129
    %v1135 = vadd.f32 %v812, %v1132
    %s1136 = scalar_lea.vmem %s6, 1
    %v1137 = vld [vmem:[%s1136] sm:$0x1]
    %v1139 = vperm.slane %v1137, 0
    %v1141 = vadd.f32 %v1134, %v1139
    %v1142 = vadd.f32 %v1135, %v1139
    %s1143 = scalar_lea.vmem [#allocation8], 1
    %v1144 = vld [vmem:[%s1143] sm:$0x1]
    %s1145 = scalar_lea.vmem [#allocation10], 1
    %v1146 = vld [vmem:[%s1145] sm:$0x1]
    %v1147 = vsel %vm209, %v1141, 0.0
    %1148 = vadd.xlane.f32.xlu0 %v1147
    %v1149 = vpop.xlane.xlu0 %1148
    %v1150 = vsel %vm209, %v1142, 0.0
    %1151 = vadd.xlane.f32.xlu0 %v1150
    %v1152 = vpop.xlane.xlu0 %1151
    %v1153 = vmul.f32 %v1149, %v222
    %v1154 = vmul.f32 %v1152, %v222
    %v1155 = vsub.f32 %v1141, %v1153
    %v1156 = vsub.f32 %v1142, %v1154
    %v1157 = vmul.f32 %v1155, %v1155
    %v1158 = vmul.f32 %v1156, %v1156
    %v1159 = vsel %vm209, %v1157, 0.0
    %1160 = vadd.xlane.f32.xlu0 %v1159
    %v1161 = vpop.xlane.xlu0 %1160
    %v1162 = vsel %vm209, %v1158, 0.0
    %1163 = vadd.xlane.f32.xlu0 %v1162
    %v1164 = vpop.xlane.xlu0 %1163
    %v1165 = vmul.f32 %v1161, %v222
    %v1166 = vmul.f32 %v1164, %v222
    %v1167 = vadd.f32 %v1165, 1e-05
    %v1168 = vadd.f32 %v1166, 1e-05
    %v1169 = vrsqrt.pop %v1167
    %v1170 = vmul.f32 %v1169, %v1167
    %v1171 = vmul.f32 %v1170, %v1169
    %v1172 = vmul.f32 0.5, %v1171
    %v1173 = vsub.f32 1.5, %v1172
    %v1174 = vmul.f32 %v1169, %v1173
    %vm1175 = vweird.f32 %v1167
    %vm1176 = vweird.f32 %v1169
    %vm1177 = vmor %vm1175, %vm1176
    %v1178 = vsel %vm1177, %v1169, %v1174
    %v1179 = vrsqrt.pop %v1168
    %v1180 = vmul.f32 %v1179, %v1168
    %v1181 = vmul.f32 %v1180, %v1179
    %v1182 = vmul.f32 0.5, %v1181
    %v1183 = vsub.f32 1.5, %v1182
    %v1184 = vmul.f32 %v1179, %v1183
    %vm1185 = vweird.f32 %v1168
    %vm1186 = vweird.f32 %v1179
    %vm1187 = vmor %vm1185, %vm1186
    %v1188 = vsel %vm1187, %v1179, %v1184
    %v1189 = vmul.f32 %v1155, %v1178
    %v1190 = vmul.f32 %v1156, %v1188
    %v1192 = vperm.slane %v1144, 0
    %v1194 = vmul.f32 %v1189, %v1192
    %v1195 = vmul.f32 %v1190, %v1192
    %v1197 = vperm.slane %v1146, 0
    %v1199 = vadd.f32 %v1194, %v1197
    %v1200 = vadd.f32 %v1195, %v1197
    %s1201 = scalar_lea.vmem %s9, 32
    %v1202 = vld [vmem:[%s1201] sm:$0xff]
    %v1203 = vld [vmem:[%s1201 + $0x8] sm:$0xff]
    %v1204 = vld [vmem:[%s1201 + $0x10] sm:$0xff]
    %v1205 = vld [vmem:[%s1201 + $0x18] sm:$0xff]
    %s1206 = scalar_lea.vmem %s10, 1
    %v1207 = vld [vmem:[%s1206] sm:$0x1]
    %v1209 = vperm.slane %v1207, 0
    %v1212 = vsel %vm209, %v1199, 0
    %v1215 = vsel %vm209, %v1200, 0
    %1217 = vmatpush.msra.mxu0 0.0
    %1218 = vmatpush.msra.mxu0 0.0
    %1219 = vmatpush.msra.mxu0 0.0
    %1220 = vmatpush.msra.mxu0 0.0
    %1221 = vmatpush.msra.mxu0 0.0
    %1222 = vmatpush.msra.mxu0 0.0
    %1223 = vmatpush.msra.mxu0 0.0
    %1224 = vmatpush.msra.mxu0 0.0
    %1225 = vmatpush.msra.mxu0 0.0
    %1226 = vmatpush.msra.mxu0 0.0
    %1227 = vmatpush.msra.mxu0 0.0
    %1228 = vmatpush.msra.mxu0 0.0
    %1229 = vmatpush.msra.mxu0 %v1205
    %1230 = vmatpush.msra.mxu0 %v1204
    %1231 = vmatpush.msra.mxu0 %v1203
    %1232 = vmatpush.msra.mxu0 %v1202
    %1233 = vmatmul.f32.gmra.mxu0 %v1212
    %v1234 = vpop.f32.mrf.mxu0
    %v1235 = vadd.f32 %v1209, %v1234
    %1236 = vmatmul.f32.gmra.mxu0 %v1215
    %v1237 = vpop.f32.mrf.mxu0
    %v1238 = vadd.f32 %v1209, %v1237
    %1239 = vdwg.mxu0
    %v1240 = vmul.f32 %v1235, 0.5
    %v1241 = vmul.f32 %v1238, 0.5
    %v1242 = vmul.f32 %v1235, 0.70710677
    %v1243 = vmul.f32 %v1238, 0.70710677
    %vm1244 = vcmp.ge.f32.partialorder %v1242, 0.0
    %vm1245 = vcmp.ge.f32.partialorder %v1243, 0.0
    %v1246 = vsel %vm1244, 1.0, -1.0
    %v1247 = vsel %vm1245, 1.0, -1.0
    %v1248 = vand.u32 2147483647, %v1242
    %v1249 = vand.u32 2147483647, %v1243
    %v1250 = vmul.f32 %v1248, 0.3275911
    %v1251 = vmul.f32 %v1249, 0.3275911
    %v1252 = vadd.f32 %v1250, 1.0
    %v1253 = vadd.f32 %v1251, 1.0
    %v1254 = vrcp.pop %v1252
    %v1255 = vmul.f32 %v1252, %v1254
    %v1256 = vsub.f32 1.0, %v1255
    %v1257 = vmul.f32 %v1254, %v1256
    %v1258 = vadd.f32 %v1254, %v1257
    %vm1259 = vweird.f32 %v1252
    %vm1260 = vweird.f32 %v1254
    %vm1261 = vmor %vm1259, %vm1260
    %v1262 = vsel %vm1261, %v1254, %v1258
    %v1263 = vand.u32 2147483647, %v1252
    %vm1264 = vcmp.eq.f32.partialorder %v1263, 8.507059e+37
    %v1265 = vand.u32 %v1252, 2147483648
    %v1266 = vor.u32 1.1754944e-38, %v1265
    %v1267 = vsel %vm1264, %v1266, %v1262
    %v1268 = vmul.f32 1.0, %v1267
    %v1269 = vrcp.pop %v1253
    %v1270 = vmul.f32 %v1253, %v1269
    %v1271 = vsub.f32 1.0, %v1270
    %v1272 = vmul.f32 %v1269, %v1271
    %v1273 = vadd.f32 %v1269, %v1272
    %vm1274 = vweird.f32 %v1253
    %vm1275 = vweird.f32 %v1269
    %vm1276 = vmor %vm1274, %vm1275
    %v1277 = vsel %vm1276, %v1269, %v1273
    %v1278 = vand.u32 2147483647, %v1253
    %vm1279 = vcmp.eq.f32.partialorder %v1278, 8.507059e+37
    %v1280 = vand.u32 %v1253, 2147483648
    %v1281 = vor.u32 1.1754944e-38, %v1280
    %v1282 = vsel %vm1279, %v1281, %v1277
    %v1283 = vmul.f32 1.0, %v1282
    %v1284 = vmul.f32 %v1268, 1.0614054
    %v1285 = vmul.f32 %v1283, 1.0614054
    %v1286 = vadd.f32 %v1284, -1.4531521
    %v1287 = vadd.f32 %v1285, -1.4531521
    %v1288 = vmul.f32 %v1286, %v1268
    %v1289 = vmul.f32 %v1287, %v1283
    %v1290 = vadd.f32 %v1288, 1.4214138
    %v1291 = vadd.f32 %v1289, 1.4214138
    %v1292 = vmul.f32 %v1290, %v1268
    %v1293 = vmul.f32 %v1291, %v1283
    %v1294 = vadd.f32 %v1292, -0.28449672
    %v1295 = vadd.f32 %v1293, -0.28449672
    %v1296 = vmul.f32 %v1294, %v1268
    %v1297 = vmul.f32 %v1295, %v1283
    %v1298 = vadd.f32 %v1296, 0.2548296
    %v1299 = vadd.f32 %v1297, 0.2548296
    %v1300 = vmul.f32 %v1298, %v1268
    %v1301 = vmul.f32 %v1299, %v1283
    %v1302 = vsub.f32 0.0, %v1248
    %v1303 = vsub.f32 0.0, %v1249
    %v1304 = vmul.f32 %v1302, %v1248
    %v1305 = vmul.f32 %v1303, %v1249
    %v1306 = vmul.f32 %v1304, 1.442695
    %v1307 = vpow.pop %v1306
    %v1308 = vmul.f32 %v1305, 1.442695
    %v1309 = vpow.pop %v1308
    %v1310 = vmul.f32 %v1300, %v1307
    %v1311 = vmul.f32 %v1301, %v1309
    %v1312 = vsub.f32 1.0, %v1310
    %v1313 = vsub.f32 1.0, %v1311
    %v1314 = vmul.f32 %v1246, %v1312
    %v1315 = vmul.f32 %v1247, %v1313
    %v1316 = vadd.f32 %v1314, 1.0
    %v1317 = vadd.f32 %v1315, 1.0
    %v1318 = vmul.f32 %v1240, %v1316
    %v1319 = vmul.f32 %v1241, %v1317
    %s1320 = scalar_lea.vmem %s11, 64
    %v1321 = vld [vmem:[%s1320] sm:$0xff]
    %v1322 = vld [vmem:[%s1320 + $0x8] sm:$0xff]
    %v1323 = vld [vmem:[%s1320 + $0x10] sm:$0xff]
    %v1324 = vld [vmem:[%s1320 + $0x18] sm:$0xff]
    %v1325 = vld [vmem:[%s1320 + $0x20] sm:$0xff]
    %v1326 = vld [vmem:[%s1320 + $0x28] sm:$0xff]
    %v1327 = vld [vmem:[%s1320 + $0x30] sm:$0xff]
    %v1328 = vld [vmem:[%s1320 + $0x38] sm:$0xff]
    %s1329 = scalar_lea.vmem %s12, 1
    %v1330 = vld [vmem:[%s1329] sm:$0x1]
    %v1332 = vperm.slane %v1330, 0
    %v1335 = vsel %vm449, %v1318, 0
    %v1338 = vsel %vm449, %v1319, 0
    %1340 = vmatpush.msra.mxu0 0.0
    %1341 = vmatpush.msra.mxu0 0.0
    %1342 = vmatpush.msra.mxu0 0.0
    %1343 = vmatpush.msra.mxu0 0.0
    %1344 = vmatpush.msra.mxu0 0.0
    %1345 = vmatpush.msra.mxu0 0.0
    %1346 = vmatpush.msra.mxu0 0.0
    %1347 = vmatpush.msra.mxu0 0.0
    %1348 = vmatpush.msra.mxu0 %v1328
    %1349 = vmatpush.msra.mxu0 %v1327
    %1350 = vmatpush.msra.mxu0 %v1326
    %1351 = vmatpush.msra.mxu0 %v1325
    %1352 = vmatpush.msra.mxu0 %v1324
    %1353 = vmatpush.msra.mxu0 %v1323
    %1354 = vmatpush.msra.mxu0 %v1322
    %1355 = vmatpush.msra.mxu0 %v1321
    %1356 = vmatmul.f32.gmra.mxu0 %v1335
    %v1357 = vpop.f32.mrf.mxu0
    %v1358 = vadd.f32 %v1332, %v1357
    %1359 = vmatmul.f32.gmra.mxu0 %v1338
    %v1360 = vpop.f32.mrf.mxu0
    %v1361 = vadd.f32 %v1332, %v1360
    %1362 = vdwg.mxu0
    %v1363 = vadd.f32 %v1141, %v1358
    %v1364 = vadd.f32 %v1142, %v1361
    %v1365 = vld [vmem:[%s13] sm:$0x1]
    %v1366 = vld [vmem:[%s14] sm:$0x1]
    %v1367 = vsel %vm209, %v1363, 0.0
    %1368 = vadd.xlane.f32.xlu0 %v1367
    %v1369 = vpop.xlane.xlu0 %1368
    %v1370 = vsel %vm209, %v1364, 0.0
    %1371 = vadd.xlane.f32.xlu0 %v1370
    %v1372 = vpop.xlane.xlu0 %1371
    %v1373 = vmul.f32 %v1369, %v222
    %v1374 = vmul.f32 %v1372, %v222
    %v1375 = vsub.f32 %v1363, %v1373
    %v1376 = vsub.f32 %v1364, %v1374
    %v1377 = vmul.f32 %v1375, %v1375
    %v1378 = vmul.f32 %v1376, %v1376
    %v1379 = vsel %vm209, %v1377, 0.0
    %1380 = vadd.xlane.f32.xlu0 %v1379
    %v1381 = vpop.xlane.xlu0 %1380
    %v1382 = vsel %vm209, %v1378, 0.0
    %1383 = vadd.xlane.f32.xlu0 %v1382
    %v1384 = vpop.xlane.xlu0 %1383
    %v1385 = vmul.f32 %v1381, %v222
    %v1386 = vmul.f32 %v1384, %v222
    %v1387 = vadd.f32 %v1385, 1e-05
    %v1388 = vadd.f32 %v1386, 1e-05
    %v1389 = vrsqrt.pop %v1387
    %v1390 = vmul.f32 %v1389, %v1387
    %v1391 = vmul.f32 %v1390, %v1389
    %v1392 = vmul.f32 0.5, %v1391
    %v1393 = vsub.f32 1.5, %v1392
    %v1394 = vmul.f32 %v1389, %v1393
    %vm1395 = vweird.f32 %v1387
    %vm1396 = vweird.f32 %v1389
    %vm1397 = vmor %vm1395, %vm1396
    %v1398 = vsel %vm1397, %v1389, %v1394
    %v1399 = vrsqrt.pop %v1388
    %v1400 = vmul.f32 %v1399, %v1388
    %v1401 = vmul.f32 %v1400, %v1399
    %v1402 = vmul.f32 0.5, %v1401
    %v1403 = vsub.f32 1.5, %v1402
    %v1404 = vmul.f32 %v1399, %v1403
    %vm1405 = vweird.f32 %v1388
    %vm1406 = vweird.f32 %v1399
    %vm1407 = vmor %vm1405, %vm1406
    %v1408 = vsel %vm1407, %v1399, %v1404
    %v1409 = vmul.f32 %v1375, %v1398
    %v1410 = vmul.f32 %v1376, %v1408
    %v1412 = vperm.slane %v1365, 0
    %v1414 = vmul.f32 %v1409, %v1412
    %v1415 = vmul.f32 %v1410, %v1412
    %v1417 = vperm.slane %v1366, 0
    %v1419 = vadd.f32 %v1414, %v1417
    %v1420 = vadd.f32 %v1415, %v1417
    %1421 = vst.msk [vmem:[#allocation11] sm:$0xff] %vm209, %v1419
    %1422 = vst.msk [vmem:[#allocation11 + $0x8] sm:$0xff] %vm209, %v1420
    // Predicated region
    $region82: #{tpu_custom_call.1} parent=1 // pred_check
      _
    $region83: #{tpu_custom_call.1} parent=1 // pred_check_branch
      %1424 = sbr.rel (0) target = $region85
    $region84: #{tpu_custom_call.1} parent=1 // pred_region
      %1426 = vsyncadd [#allocation4], 0
      %s1427 = sshll.u32 [#allocation11], 4
      %s1428 = int_to_ptr.vmem [resolvable:$true] %s1427
      %s1429 = sshll.u32 %s15, 4
      %s1430 = int_to_ptr.hbm [resolvable:$true] %s1429
      %1435 = dma.vmem_to_hbm [thread:$0]  %s1428, 256, %s1430, [#allocation4], 128, 128, 8
    $region85: #{tpu_custom_call.1} parent=1 // pred_fallthru
      _
    // Predicated region
    $region86: #{tpu_custom_call.1} parent=1 // pred_check
      _
    $region87: #{tpu_custom_call.1} parent=1 // pred_check_branch
      %1437 = sbr.rel (0) target = $region89
    $region88: #{tpu_custom_call.1} parent=1 // pred_region
      %1439 = dma.done [#allocation4], 256
    $region89: #{tpu_custom_call.1} parent=1 // pred_fallthru
      _
    %1440 = vsyncpa [#allocation3], 1
    %1441 = vsyncpa [#allocation6], 1
    %1442 = vsyncpa [#allocation9], 1
    %1443 = vsyncpa [#allocation4], 1

</llo_original>
